<compile_context>
chip_gen: v5e
topology: v5e:2x2
jax: 0.10.0
libtpu: 0.0.40
codegen_flags: <defaults>
</compile_context>

<pallas_src>
import functools
import math

import jax
import jax.numpy as jnp
from jax import lax
from jax.experimental import pallas as pl
from jax.experimental.pallas import tpu as pltpu


# -----------------------------------------------------------------------------
# Small helpers
# -----------------------------------------------------------------------------
def _round_up(x, m):
    return (x + m - 1) // m * m


@functools.lru_cache(maxsize=None)
def _vmem_limit():
    # Generation-aware budget: ~75% of physical VMEM (96 MiB on v5e/v6e, 48 MiB
    # on v7x).  Falls back to a conservative 64 MiB if the query is unavailable.
    try:
        return int(pltpu.get_tpu_info().vmem_capacity_bytes * 3 // 4)
    except Exception:  # pragma: no cover - defensive
        return 64 * 1024 * 1024


def _compiler_params(**kw):
    cls = getattr(pltpu, "CompilerParams", None)
    if cls is None:  # very old jax fallback
        cls = getattr(pltpu, "TPUCompilerParams")
    return cls(**kw)


def _pad_rows(x2, rows):
    if x2.shape[0] == rows:
        return x2
    return jnp.pad(x2, ((0, rows - x2.shape[0]), (0, 0)))


def _heads_per_step(num_heads, head_dim):
    """Smallest divisor g of num_heads with g*head_dim % 128 == 0 (lane-dense
    packed blocks); falls back to all heads (full-width blocks are always legal)."""
    for g in range(1, num_heads + 1):
        if num_heads % g == 0 and (g * head_dim) % 128 == 0:
            return g
    return num_heads


# -----------------------------------------------------------------------------
# Fused QKV projection + bias + per-head RMS norm (Q, K only), resident weights
# -----------------------------------------------------------------------------
def _qkv_kernel(x_ref, w_ref, b_ref, gq_ref, gk_ref, seg_ref,
                qo_ref, ko_ref, vo_ref, *, dout, head_dim, eps):
    x = x_ref[...]                                        # (tm, Din), input dtype
    # One fused MXU dot for Q|K|V; f32 accumulation.
    acc = jnp.dot(x, w_ref[...], preferred_element_type=jnp.float32)   # (tm, 3*Dout)
    y = acc + b_ref[...].astype(jnp.float32)
    yq = y[:, :dout]
    yk = y[:, dout:2 * dout]
    yv = y[:, 2 * dout:]

    seg = seg_ref[...]                                    # (Dout, H) block-diag indicator

    def head_rms(t, g_ref):
        # Per-head sum of squares via MXU -> stays lane-dense, no (N, head_dim) relayout.
        ss = jnp.dot(t * t, seg, preferred_element_type=jnp.float32)    # (tm, H)
        inv = lax.rsqrt(ss * (1.0 / head_dim) + eps)                     # (tm, H)
        inv_full = lax.dot_general(                                      # (tm, Dout)
            inv, seg, dimension_numbers=(((1,), (1,)), ((), ())),
            preferred_element_type=jnp.float32)
        return t * inv_full * g_ref[...].astype(jnp.float32)

    qo_ref[...] = head_rms(yq, gq_ref).astype(qo_ref.dtype)
    ko_ref[...] = head_rms(yk, gk_ref).astype(ko_ref.dtype)
    vo_ref[...] = yv.astype(vo_ref.dtype)


def qkv_norm_projection(x, q_wb, k_wb, v_wb, gamma_q, gamma_k, *,
                        num_heads, head_dim, eps=1e-6, q_scale=1.0, tm_target=256):
    """x: (B, S, Din) -> q, k, v each (B, S, H*D); RMS-norm applied to q, k.
    `q_scale` (the attention 1/sqrt(D)) is folded into gamma_q for free."""
    B, S, Din = x.shape
    wq, bq = q_wb
    wk, bk = k_wb
    wv, bv = v_wb
    Dout = wq.shape[1]
    M = B * S
    tm = min(tm_target, _round_up(M, 8))
    Mp = _round_up(M, tm)
    x2 = _pad_rows(x.reshape(M, Din), Mp)

    # Fused, pre-transposed weight: one contiguous resident (Din, 3*Dout) block.
    # NOTE: for v7x (64 MiB VMEM) feed bf16 weights so the resident block fits.
    w = jnp.concatenate([wq, wk, wv], axis=1)                         # (Din, 3*Dout)
    b = jnp.concatenate([bq, bk, bv]).reshape(1, 3 * Dout)
    gq = (jnp.tile(gamma_q, num_heads) * q_scale).reshape(1, Dout)
    gk = jnp.tile(gamma_k, num_heads).reshape(1, Dout)
    seg = jnp.repeat(jnp.eye(num_heads, dtype=jnp.float32), head_dim, axis=0)  # (Dout, H)

    kernel = functools.partial(_qkv_kernel, dout=Dout, head_dim=head_dim, eps=eps)
    const = lambda i: (0, 0)   # weight / bias / gamma / seg are VMEM-resident (DMA'd once)

    q, k, v = pl.pallas_call(
        kernel,
        out_shape=tuple(jax.ShapeDtypeStruct((Mp, Dout), x.dtype) for _ in range(3)),
        grid=(Mp // tm,),
        in_specs=[
            pl.BlockSpec((tm, Din), lambda i: (i, 0)),
            pl.BlockSpec((Din, 3 * Dout), const),
            pl.BlockSpec((1, 3 * Dout), const),
            pl.BlockSpec((1, Dout), const),
            pl.BlockSpec((1, Dout), const),
            pl.BlockSpec((Dout, num_heads), const),
        ],
        out_specs=[pl.BlockSpec((tm, Dout), lambda i: (i, 0))] * 3,
        compiler_params=_compiler_params(
            dimension_semantics=("parallel",),
            vmem_limit_bytes=_vmem_limit()),
    )(x2, w, b, gq, gk, seg)

    def unpad(t):
        return t[:M].reshape(B, S, Dout)

    return unpad(q), unpad(k), unpad(v)


# -----------------------------------------------------------------------------
# Output projections: y = x @ w + b with a fully VMEM-resident weight
# -----------------------------------------------------------------------------
def _linear_kernel(x_ref, w_ref, b_ref, o_ref):
    o_ref[...] = (jnp.dot(x_ref[...], w_ref[...], preferred_element_type=jnp.float32)
                  + b_ref[...].astype(jnp.float32)).astype(o_ref.dtype)


def linear(x, w, b, *, tm_target=256):
    lead = x.shape[:-1]
    din, dout = w.shape
    x2 = x.reshape(-1, din)
    M = x2.shape[0]
    tm = min(tm_target, _round_up(M, 8))
    Mp = _round_up(M, tm)
    x2 = _pad_rows(x2, Mp)

    out = pl.pallas_call(
        _linear_kernel,
        out_shape=jax.ShapeDtypeStruct((Mp, dout), x.dtype),
        grid=(Mp // tm,),
        in_specs=[
            pl.BlockSpec((tm, din), lambda i: (i, 0)),
            pl.BlockSpec((din, dout), lambda i: (0, 0)),   # resident weight, DMA'd once
            pl.BlockSpec((1, dout), lambda i: (0, 0)),
        ],
        out_specs=pl.BlockSpec((tm, dout), lambda i: (i, 0)),
        compiler_params=_compiler_params(
            dimension_semantics=("parallel",),
            vmem_limit_bytes=_vmem_limit()),
    )(x2, w, b.reshape(1, dout))
    return out[:M].reshape(*lead, dout)


# -----------------------------------------------------------------------------
# Flash attention (non-causal): K/V resident per head-group, in-kernel Sk loop,
# output written directly in the packed (B, S, H*D) layout.
# -----------------------------------------------------------------------------
def _flash_kernel(q_ref, k_ref, v_ref, o_ref, *,
                  heads_per_step, head_dim, tk, n_chunks, sk_valid, needs_mask):
    tq = q_ref.shape[1]
    q_all = q_ref[0]                                       # (tq, hp*D) packed heads
    outs = []
    for h in range(heads_per_step):
        qh = q_all[:, h * head_dim:(h + 1) * head_dim]     # (tq, D) static lane slice

        def step(start, carry, masked):
            m, l, acc = carry
            k = k_ref[0, h, pl.ds(start, tk), :]           # (tk, D) from resident K
            v = v_ref[0, h, pl.ds(start, tk), :]
            s = lax.dot_general(qh, k, dimension_numbers=(((1,), (1,)), ((), ())),
                                preferred_element_type=jnp.float32)      # (tq, tk)
            if masked:
                col = lax.broadcasted_iota(jnp.int32, s.shape, 1) + (n_chunks - 1) * tk
                s = jnp.where(col < sk_valid, s, -jnp.inf)
            m_new = jnp.maximum(m, s.max(axis=-1, keepdims=True))
            alpha = jnp.exp(m - m_new)
            p = jnp.exp(s - m_new)
            l_new = alpha * l + p.sum(axis=-1, keepdims=True)
            acc_new = alpha * acc + jnp.dot(p.astype(v.dtype), v,
                                            preferred_element_type=jnp.float32)
            return m_new, l_new, acc_new

        carry = (jnp.full((tq, 1), -jnp.inf, jnp.float32),
                 jnp.zeros((tq, 1), jnp.float32),
                 jnp.zeros((tq, head_dim), jnp.float32))

        def body(c, carry):
            return step(pl.multiple_of(c * tk, 128), carry, masked=False)

        # Full (unmasked) chunks, then the last chunk (masked only if Sk was padded).
        carry = lax.fori_loop(0, n_chunks - 1, body, carry)
        _, l, acc = step((n_chunks - 1) * tk, carry, masked=needs_mask)

        inv = pl.reciprocal(l, approx=True)
        inv = inv * (2.0 - l * inv)                        # one Newton step -> f32 accuracy
        outs.append(acc * inv)

    out = outs[0] if heads_per_step == 1 else jnp.concatenate(outs, axis=1)
    o_ref[0] = out.astype(o_ref.dtype)                     # lane-dense (tq, hp*D) store


def flash_attention(q_packed, k4, v4, *, num_heads, head_dim,
                    tq_target=256, tk_target=512):
    """q_packed: (B, Sq, H*D); k4, v4: (B, H, Sk, D).  Returns (B, Sq, H*D).
    The softmax scale is expected to be pre-folded into Q (via gamma_q)."""
    B, Sq, HD = q_packed.shape
    assert HD == num_heads * head_dim
    Sk = k4.shape[2]

    hp = _heads_per_step(num_heads, head_dim)
    G = num_heads // hp
    tq = min(tq_target, _round_up(Sq, 8))
    Sq_pad = _round_up(Sq, tq)
    tk = min(tk_target, _round_up(Sk, 128))                # lane-dense score tiles
    Sk_pad = _round_up(Sk, tk)
    n_chunks = Sk_pad // tk
    needs_mask = Sk_pad != Sk

    if Sq_pad != Sq:
        q_packed = jnp.pad(q_packed, ((0, 0), (0, Sq_pad - Sq), (0, 0)))
    if Sk_pad != Sk:
        kv_pad = ((0, 0), (0, 0), (0, Sk_pad - Sk), (0, 0))
        k4 = jnp.pad(k4, kv_pad)
        v4 = jnp.pad(v4, kv_pad)

    kernel = functools.partial(
        _flash_kernel, heads_per_step=hp, head_dim=head_dim, tk=tk,
        n_chunks=n_chunks, sk_valid=Sk, needs_mask=needs_mask)

    out = pl.pallas_call(
        kernel,
        out_shape=jax.ShapeDtypeStruct((B, Sq_pad, HD), q_packed.dtype),
        grid=(B, G, Sq_pad // tq),
        in_specs=[
            # Packed Q: (1, tq, hp*D) column block per head-group.
            pl.BlockSpec((1, tq, hp * head_dim), lambda b, g, qi: (b, qi, g)),
            # Resident K/V: index depends only on (b, g); qi is the innermost
            # ("arbitrary") axis so they are DMA'd once per head-group.
            pl.BlockSpec((1, hp, Sk_pad, head_dim), lambda b, g, qi: (b, g, 0, 0)),
            pl.BlockSpec((1, hp, Sk_pad, head_dim), lambda b, g, qi: (b, g, 0, 0)),
        ],
        out_specs=pl.BlockSpec((1, tq, hp * head_dim), lambda b, g, qi: (b, qi, g)),
        compiler_params=_compiler_params(
            dimension_semantics=("parallel", "parallel", "arbitrary"),
            vmem_limit_bytes=_vmem_limit()),
    )(q_packed, k4, v4)

    return out[:, :Sq]                                     # (B, Sq, H*D)


# -----------------------------------------------------------------------------
# Parameter init (deterministic, synthetic).  Weights stored as (Din, Dout).
# -----------------------------------------------------------------------------
def init_params(key, *, query_dim, dim_head, heads, out_dim,
                added_kv_proj_dim, context_pre_only, dtype=jnp.float32):
    keys = iter(jax.random.split(key, 64))

    def lin(din, dout):
        w = jax.random.normal(next(keys), (din, dout), dtype) * 0.02
        b = jax.random.normal(next(keys), (dout,), dtype) * 0.02
        return (w, b)

    def gamma(d):
        return 1.0 + 0.1 * jax.random.normal(next(keys), (d,), dtype)

    p = {
        "to_q": lin(query_dim, out_dim),
        "to_k": lin(query_dim, out_dim),
        "to_v": lin(query_dim, out_dim),
        "norm_q": gamma(dim_head),
        "norm_k": gamma(dim_head),
        "to_out": lin(out_dim, out_dim),
    }
    if added_kv_proj_dim > 0:
        p["add_q_proj"] = lin(added_kv_proj_dim, out_dim)
        p["add_k_proj"] = lin(added_kv_proj_dim, out_dim)
        p["add_v_proj"] = lin(added_kv_proj_dim, out_dim)
        p["norm_added_q"] = gamma(dim_head)
        p["norm_added_k"] = gamma(dim_head)
    if not context_pre_only:
        p["to_add_out"] = lin(out_dim, out_dim)
    return p


# -----------------------------------------------------------------------------
# Forward pass (Pallas kernels on the hot path)
# -----------------------------------------------------------------------------
def attention_forward(params, spatial, prompt, *, num_heads, head_dim,
                      context_pre_only):
    B, S_sp, _ = spatial.shape
    q_scale = 1.0 / math.sqrt(head_dim)

    q, k, v = qkv_norm_projection(
        spatial, params["to_q"], params["to_k"], params["to_v"],
        params["norm_q"], params["norm_k"],
        num_heads=num_heads, head_dim=head_dim, q_scale=q_scale)

    if prompt is not None:
        pq, pk, pv = qkv_norm_projection(
            prompt, params["add_q_proj"], params["add_k_proj"], params["add_v_proj"],
            params["norm_added_q"], params["norm_added_k"],
            num_heads=num_heads, head_dim=head_dim, q_scale=q_scale)
        # TODO(synk): write spatial/prompt projections directly into one
        # (B, S_total, H*D) buffer at their row offsets (input_output_aliases) to
        # drop these concats; per-head 64-lane column BlockSpecs are layout-illegal
        # so K/V still go through one (B,H,S,D) relayout below.
        q = jnp.concatenate([q, pq], axis=1)
        k = jnp.concatenate([k, pk], axis=1)
        v = jnp.concatenate([v, pv], axis=1)

    S_total = q.shape[1]

    def to_heads(t):   # (B, S, H*D) -> (B, H, S, D) for the resident K/V blocks
        return t.reshape(B, S_total, num_heads, head_dim).transpose(0, 2, 1, 3)

    # Q stays packed; output comes back packed (B, S, H*D) -> no output transpose.
    out = flash_attention(q, to_heads(k), to_heads(v),
                          num_heads=num_heads, head_dim=head_dim)

    prompt_out = None
    if prompt is not None:
        spatial_part, prompt_part = out[:, :S_sp], out[:, S_sp:]
        if not context_pre_only:
            prompt_out = linear(prompt_part, *params["to_add_out"])
        else:
            prompt_out = prompt_part
        out = spatial_part

    spatial_out = linear(out, *params["to_out"])
    return spatial_out, prompt_out


# -----------------------------------------------------------------------------
# Pure-JAX reference (for correctness check of the Pallas kernels)
# -----------------------------------------------------------------------------
def _ref_linear(x, w, b):
    return x @ w + b


def _ref_rmsnorm(x, g, eps=1e-6):
    var = jnp.mean(x * x, axis=-1, keepdims=True)
    return x * lax.rsqrt(var + eps) * g


def attention_forward_ref(params, spatial, prompt, *, num_heads, head_dim,
                          context_pre_only):
    B, S_sp, _ = spatial.shape

    def to_heads(t):
        return t.reshape(B, -1, num_heads, head_dim).transpose(0, 2, 1, 3)

    q = _ref_rmsnorm(to_heads(_ref_linear(spatial, *params["to_q"])), params["norm_q"])
    k = _ref_rmsnorm(to_heads(_ref_linear(spatial, *params["to_k"])), params["norm_k"])
    v = to_heads(_ref_linear(spatial, *params["to_v"]))

    if prompt is not None:
        pq = _ref_rmsnorm(to_heads(_ref_linear(prompt, *params["add_q_proj"])),
                          params["norm_added_q"])
        pk = _ref_rmsnorm(to_heads(_ref_linear(prompt, *params["add_k_proj"])),
                          params["norm_added_k"])
        pv = to_heads(_ref_linear(prompt, *params["add_v_proj"]))
        q = jnp.concatenate([q, pq], axis=2)
        k = jnp.concatenate([k, pk], axis=2)
        v = jnp.concatenate([v, pv], axis=2)

    scale = 1.0 / math.sqrt(head_dim)
    s = jnp.einsum("bhqd,bhkd->bhqk", q, k) * scale
    p = jax.nn.softmax(s, axis=-1)
    out = jnp.einsum("bhqk,bhkd->bhqd", p, v)
    out = out.transpose(0, 2, 1, 3).reshape(B, -1, num_heads * head_dim)

    prompt_out = None
    if prompt is not None:
        spatial_part, prompt_part = out[:, :S_sp], out[:, S_sp:]
        if not context_pre_only:
            prompt_out = _ref_linear(prompt_part, *params["to_add_out"])
        else:
            prompt_out = prompt_part
        out = spatial_part

    return _ref_linear(out, *params["to_out"]), prompt_out


# -----------------------------------------------------------------------------
if __name__ == "__main__":
    jax.config.update("jax_default_matmul_precision", "highest")

    # Module hyper-parameters (out_dim must equal heads * dim_head).
    query_dim = 32
    dim_head = 16
    heads = 2
    out_dim = heads * dim_head            # 32
    added_kv_proj_dim = 32
    context_pre_only = False

    key = jax.random.PRNGKey(0)
    k_params, k_sp, k_pr = jax.random.split(key, 3)

    params = init_params(
        k_params,
        query_dim=query_dim, dim_head=dim_head, heads=heads, out_dim=out_dim,
        added_kv_proj_dim=added_kv_proj_dim, context_pre_only=context_pre_only)

    spatial = jax.random.normal(k_sp, (2, 16, query_dim), jnp.float32)
    prompt = jax.random.normal(k_pr, (2, 8, added_kv_proj_dim), jnp.float32)

    spatial_out, prompt_out = attention_forward(
        params, spatial, prompt,
        num_heads=heads, head_dim=dim_head, context_pre_only=context_pre_only)
    spatial_out = jax.block_until_ready(spatial_out)
    prompt_out = jax.block_until_ready(prompt_out)

    ref_sp, ref_pr = attention_forward_ref(
        params, spatial, prompt,
        num_heads=heads, head_dim=dim_head, context_pre_only=context_pre_only)

    assert spatial_out.shape == (2, 16, out_dim)
    assert prompt_out.shape == (2, 8, out_dim)
    assert jnp.allclose(spatial_out, ref_sp, atol=2e-3, rtol=2e-3)
    assert jnp.allclose(prompt_out, ref_pr, atol=2e-3, rtol=2e-3)

    print("KERNEL_OK")
</pallas_src>

<mosaic_0001>
module attributes {stable_mosaic.version = 11 : i64} {
  func.func @_qkv_kernel(%arg0: i32, %arg1: memref<32x32xf32, #tpu.memory_space<vmem>>, %arg2: memref<32x96xf32, #tpu.memory_space<vmem>>, %arg3: memref<1x96xf32, #tpu.memory_space<vmem>>, %arg4: memref<1x32xf32, #tpu.memory_space<vmem>>, %arg5: memref<1x32xf32, #tpu.memory_space<vmem>>, %arg6: memref<32x2xf32, #tpu.memory_space<vmem>>, %arg7: memref<32x32xf32, #tpu.memory_space<vmem>>, %arg8: memref<32x32xf32, #tpu.memory_space<vmem>>, %arg9: memref<32x32xf32, #tpu.memory_space<vmem>>) attributes {dimension_semantics = [#tpu.dimension_semantics<parallel>], iteration_bounds = array<i64: 1>, scalar_prefetch = 0 : i64, scratch_operands = 0 : i64, tpu.core_type = #tpu.core_type<tc>, window_params = [{transform_indices = @transform_0, window_bounds = array<i64: 32, 32>}, {pipeline_mode = #tpu.pipeline_mode<synchronous>, transform_indices = @transform_1, window_bounds = array<i64: 32, 96>}, {pipeline_mode = #tpu.pipeline_mode<synchronous>, transform_indices = @transform_2, window_bounds = array<i64: 1, 96>}, {pipeline_mode = #tpu.pipeline_mode<synchronous>, transform_indices = @transform_3, window_bounds = array<i64: 1, 32>}, {pipeline_mode = #tpu.pipeline_mode<synchronous>, transform_indices = @transform_4, window_bounds = array<i64: 1, 32>}, {pipeline_mode = #tpu.pipeline_mode<synchronous>, transform_indices = @transform_5, window_bounds = array<i64: 32, 2>}, {transform_indices = @transform_6, window_bounds = array<i64: 32, 32>}, {transform_indices = @transform_7, window_bounds = array<i64: 32, 32>}, {transform_indices = @transform_8, window_bounds = array<i64: 32, 32>}]} {
    %c0 = arith.constant 0 : index
    %c0_0 = arith.constant 0 : index
    %0 = vector.load %arg1[%c0, %c0_0] : memref<32x32xf32, #tpu.memory_space<vmem>>, vector<32x32xf32>
    %c0_1 = arith.constant 0 : index
    %c0_2 = arith.constant 0 : index
    %1 = vector.load %arg2[%c0_1, %c0_2] : memref<32x96xf32, #tpu.memory_space<vmem>>, vector<32x96xf32>
    %cst = arith.constant dense<0.000000e+00> : vector<32x96xf32>
    %2 = tpu.matmul %0, %1, %cst {dimension_numbers = #tpu.dot_dimension_numbers<[1], [0], [0], [1], [0, 0, 1, 1], [], []>, precision = #tpu.contract_precision<fp32>} : vector<32x32xf32>, vector<32x96xf32>, vector<32x96xf32> -> vector<32x96xf32>
    %c0_3 = arith.constant 0 : index
    %c0_4 = arith.constant 0 : index
    %3 = vector.load %arg3[%c0_3, %c0_4] : memref<1x96xf32, #tpu.memory_space<vmem>>, vector<1x96xf32>
    %4 = vector.broadcast %3 : vector<1x96xf32> to vector<32x96xf32>
    %5 = arith.addf %2, %4 : vector<32x96xf32>
    %6 = vector.extract_strided_slice %5 {offsets = [0, 0], sizes = [32, 32], strides = [1, 1]} : vector<32x96xf32> to vector<32x32xf32>
    %7 = vector.extract_strided_slice %5 {offsets = [0, 32], sizes = [32, 32], strides = [1, 1]} : vector<32x96xf32> to vector<32x32xf32>
    %8 = vector.extract_strided_slice %5 {offsets = [0, 64], sizes = [32, 32], strides = [1, 1]} : vector<32x96xf32> to vector<32x32xf32>
    %c0_5 = arith.constant 0 : index
    %c0_6 = arith.constant 0 : index
    %9 = vector.load %arg6[%c0_5, %c0_6] : memref<32x2xf32, #tpu.memory_space<vmem>>, vector<32x2xf32>
    %10 = arith.mulf %6, %6 : vector<32x32xf32>
    %cst_7 = arith.constant dense<0.000000e+00> : vector<32x2xf32>
    %11 = tpu.matmul %10, %9, %cst_7 {dimension_numbers = #tpu.dot_dimension_numbers<[1], [0], [0], [1], [0, 0, 1, 1], [], []>, precision = #tpu.contract_precision<fp32>} : vector<32x32xf32>, vector<32x2xf32>, vector<32x2xf32> -> vector<32x2xf32>
    %cst_8 = arith.constant 6.250000e-02 : f32
    %12 = vector.broadcast %cst_8 : f32 to vector<32x2xf32>
    %13 = arith.mulf %11, %12 : vector<32x2xf32>
    %cst_9 = arith.constant 9.99999997E-7 : f32
    %14 = vector.broadcast %cst_9 : f32 to vector<32x2xf32>
    %15 = arith.addf %13, %14 : vector<32x2xf32>
    %16 = math.rsqrt %15 : vector<32x2xf32>
    %cst_10 = arith.constant dense<0.000000e+00> : vector<32x32xf32>
    %17 = tpu.matmul %16, %9, %cst_10 {dimension_numbers = #tpu.dot_dimension_numbers<[1], [1], [0], [0], [0, 0, 1, 0], [], []>, precision = #tpu.contract_precision<fp32>} : vector<32x2xf32>, vector<32x2xf32>, vector<32x32xf32> -> vector<32x32xf32>
    %18 = arith.mulf %6, %17 : vector<32x32xf32>
    %c0_11 = arith.constant 0 : index
    %c0_12 = arith.constant 0 : index
    %19 = vector.load %arg4[%c0_11, %c0_12] : memref<1x32xf32, #tpu.memory_space<vmem>>, vector<1x32xf32>
    %20 = vector.broadcast %19 : vector<1x32xf32> to vector<32x32xf32>
    %21 = arith.mulf %18, %20 : vector<32x32xf32>
    %c0_13 = arith.constant 0 : index
    %c0_14 = arith.constant 0 : index
    %22 = vector.load %arg7[%c0_13, %c0_14] : memref<32x32xf32, #tpu.memory_space<vmem>>, vector<32x32xf32>
    tpu.vector_store %arg7[%c0_13, %c0_14], %21 {strides = array<i32>} : memref<32x32xf32, #tpu.memory_space<vmem>>, vector<32x32xf32>,
    %23 = arith.mulf %7, %7 : vector<32x32xf32>
    %cst_15 = arith.constant dense<0.000000e+00> : vector<32x2xf32>
    %24 = tpu.matmul %23, %9, %cst_15 {dimension_numbers = #tpu.dot_dimension_numbers<[1], [0], [0], [1], [0, 0, 1, 1], [], []>, precision = #tpu.contract_precision<fp32>} : vector<32x32xf32>, vector<32x2xf32>, vector<32x2xf32> -> vector<32x2xf32>
    %cst_16 = arith.constant 6.250000e-02 : f32
    %25 = vector.broadcast %cst_16 : f32 to vector<32x2xf32>
    %26 = arith.mulf %24, %25 : vector<32x2xf32>
    %cst_17 = arith.constant 9.99999997E-7 : f32
    %27 = vector.broadcast %cst_17 : f32 to vector<32x2xf32>
    %28 = arith.addf %26, %27 : vector<32x2xf32>
    %29 = math.rsqrt %28 : vector<32x2xf32>
    %cst_18 = arith.constant dense<0.000000e+00> : vector<32x32xf32>
    %30 = tpu.matmul %29, %9, %cst_18 {dimension_numbers = #tpu.dot_dimension_numbers<[1], [1], [0], [0], [0, 0, 1, 0], [], []>, precision = #tpu.contract_precision<fp32>} : vector<32x2xf32>, vector<32x2xf32>, vector<32x32xf32> -> vector<32x32xf32>
    %31 = arith.mulf %7, %30 : vector<32x32xf32>
    %c0_19 = arith.constant 0 : index
    %c0_20 = arith.constant 0 : index
    %32 = vector.load %arg5[%c0_19, %c0_20] : memref<1x32xf32, #tpu.memory_space<vmem>>, vector<1x32xf32>
    %33 = vector.broadcast %32 : vector<1x32xf32> to vector<32x32xf32>
    %34 = arith.mulf %31, %33 : vector<32x32xf32>
    %c0_21 = arith.constant 0 : index
    %c0_22 = arith.constant 0 : index
    %35 = vector.load %arg8[%c0_21, %c0_22] : memref<32x32xf32, #tpu.memory_space<vmem>>, vector<32x32xf32>
    tpu.vector_store %arg8[%c0_21, %c0_22], %34 {strides = array<i32>} : memref<32x32xf32, #tpu.memory_space<vmem>>, vector<32x32xf32>,
    %c0_23 = arith.constant 0 : index
    %c0_24 = arith.constant 0 : index
    %36 = vector.load %arg9[%c0_23, %c0_24] : memref<32x32xf32, #tpu.memory_space<vmem>>, vector<32x32xf32>
    tpu.vector_store %arg9[%c0_23, %c0_24], %8 {strides = array<i32>} : memref<32x32xf32, #tpu.memory_space<vmem>>, vector<32x32xf32>,
    return
  }
  func.func @transform_0(%arg0: i32) -> (i32, i32) {
    %c0_i32 = arith.constant 0 : i32
    %c0_i32_0 = arith.constant 0 : i32
    return %arg0, %c0_i32 : i32, i32
  }
  func.func @transform_1(%arg0: i32) -> (i32, i32) {
    %c0_i32 = arith.constant 0 : i32
    %c0_i32_0 = arith.constant 0 : i32
    %c0_i32_1 = arith.constant 0 : i32
    return %c0_i32, %c0_i32_0 : i32, i32
  }
  func.func @transform_2(%arg0: i32) -> (i32, i32) {
    %c0_i32 = arith.constant 0 : i32
    %c0_i32_0 = arith.constant 0 : i32
    %c0_i32_1 = arith.constant 0 : i32
    return %c0_i32, %c0_i32_0 : i32, i32
  }
  func.func @transform_3(%arg0: i32) -> (i32, i32) {
    %c0_i32 = arith.constant 0 : i32
    %c0_i32_0 = arith.constant 0 : i32
    %c0_i32_1 = arith.constant 0 : i32
    return %c0_i32, %c0_i32_0 : i32, i32
  }
  func.func @transform_4(%arg0: i32) -> (i32, i32) {
    %c0_i32 = arith.constant 0 : i32
    %c0_i32_0 = arith.constant 0 : i32
    %c0_i32_1 = arith.constant 0 : i32
    return %c0_i32, %c0_i32_0 : i32, i32
  }
  func.func @transform_5(%arg0: i32) -> (i32, i32) {
    %c0_i32 = arith.constant 0 : i32
    %c0_i32_0 = arith.constant 0 : i32
    %c0_i32_1 = arith.constant 0 : i32
    return %c0_i32, %c0_i32_0 : i32, i32
  }
  func.func @transform_6(%arg0: i32) -> (i32, i32) {
    %c0_i32 = arith.constant 0 : i32
    %c0_i32_0 = arith.constant 0 : i32
    return %arg0, %c0_i32 : i32, i32
  }
  func.func @transform_7(%arg0: i32) -> (i32, i32) {
    %c0_i32 = arith.constant 0 : i32
    %c0_i32_0 = arith.constant 0 : i32
    return %arg0, %c0_i32 : i32, i32
  }
  func.func @transform_8(%arg0: i32) -> (i32, i32) {
    %c0_i32 = arith.constant 0 : i32
    %c0_i32_0 = arith.constant 0 : i32
    return %arg0, %c0_i32 : i32, i32
  }
}

</mosaic_0001>

<llo_original>
// kernel: tpu_custom_call.1
$region0: #{tpu_custom_call.1}
  #allocation0 [shape = 'u32[]', space=smem, size = 0x4, offset = 0x4, fixed_abs, tag = 'smem constant byte address 0x4 - core index']
  #allocation1 [shape = 'u32[72,128]{1,0:T(1,128)}', space=vmem, size = 0x9000, scoped, tag = 'internal scratch']
  %s0 = inlined_call_operand.vmem [shape: f32[32,32], index: 0, kind: input, shape index: {}]
  %s1 = inlined_call_operand.hbm [shape: f32[32,96], index: 1, kind: input, shape index: {}]
  %s2 = inlined_call_operand.vmem [shape: f32[1,96], index: 2, kind: input, shape index: {}]
  %s3 = inlined_call_operand.vmem [shape: f32[1,32], index: 3, kind: input, shape index: {}]
  %s4 = inlined_call_operand.vmem [shape: f32[1,32], index: 4, kind: input, shape index: {}]
  %s5 = inlined_call_operand.vmem [shape: f32[32,2], index: 5, kind: input, shape index: {}]
  %s6 = inlined_call_operand.hbm [shape: f32[32,32], index: 6, kind: output, shape index: {0}]
  %s7 = inlined_call_operand.hbm [shape: f32[32,32], index: 7, kind: output, shape index: {1}]
  %s8 = inlined_call_operand.hbm [shape: f32[32,32], index: 8, kind: output, shape index: {2}]
  %9 = xla_tuple %s6, %s7, %s8
  %s10 = sld [smem:[#allocation0]]
  $region54: #{tpu_custom_call.1} parent=0
    _
  %s12 = ssub.s32 1, %s10
  %s13 = scalar_select 0, %s12, %s10
  $region1: #{tpu_custom_call.1} parent=0
    #allocation2 [shape = 'u8[16384]{0}', space=vmem, size = 0x4000, scoped, tag = 'input window, operand 1, single buffered']
    #allocation3 [shape = 's32[1]{0}', space=sflag, size = 0x4, scoped, tag = 'scoped memory for tpu_custom_call.1']
    #allocation4 [shape = 's32[1]{0}', space=sflag, size = 0x4, scoped, tag = 'scoped memory for tpu_custom_call.1']
    #allocation5 [shape = 'u8[16384]{0}', space=vmem, size = 0x4000, scoped, tag = 'output window, operand 0, single buffered']
    #allocation6 [shape = 'u8[16384]{0}', space=vmem, size = 0x4000, scoped, tag = 'output window, operand 1, single buffered']
    #allocation7 [shape = 's32[1]{0}', space=sflag, size = 0x4, scoped, tag = 'scoped memory for tpu_custom_call.1']
    #allocation8 [shape = 'u8[16384]{0}', space=vmem, size = 0x4000, scoped, tag = 'output window, operand 2, single buffered']
    %14 = vsyncpa [#allocation3], 0
    %15 = vsyncpa [#allocation4], 0
    %16 = vsyncpa [#allocation7], 0
    // Predicated region
    $region2: #{tpu_custom_call.1} parent=1 // pred_check
      _
    $region3: #{tpu_custom_call.1} parent=1 // pred_check_branch
      %18 = sbr.rel (0) target = $region5
    $region4: #{tpu_custom_call.1} parent=1 // pred_region
      _
    $region5: #{tpu_custom_call.1} parent=1 // pred_fallthru
      _
    // Predicated region
    $region6: #{tpu_custom_call.1} parent=1 // pred_check
      _
    $region7: #{tpu_custom_call.1} parent=1 // pred_check_branch
      %20 = sbr.rel (0) target = $region9
    $region8: #{tpu_custom_call.1} parent=1 // pred_region
      %22 = vsyncadd [#allocation3], 0
      %s23 = sshll.u32 %s1, 4
      %s24 = int_to_ptr.hbm [resolvable:$true] %s23
      %s25 = sshll.u32 [#allocation2], 4
      %s26 = int_to_ptr.vmem [resolvable:$true] %s25
      %31 = dma.hbm_to_vmem [thread:$0]  %s24, 512, %s26, [#allocation3], 128, 128, 8
    $region9: #{tpu_custom_call.1} parent=1 // pred_fallthru
      _
    // Predicated region
    $region10: #{tpu_custom_call.1} parent=1 // pred_check
      _
    $region11: #{tpu_custom_call.1} parent=1 // pred_check_branch
      %33 = sbr.rel (0) target = $region13
    $region12: #{tpu_custom_call.1} parent=1 // pred_region
      _
    $region13: #{tpu_custom_call.1} parent=1 // pred_fallthru
      _
    // Predicated region
    $region14: #{tpu_custom_call.1} parent=1 // pred_check
      _
    $region15: #{tpu_custom_call.1} parent=1 // pred_check_branch
      %35 = sbr.rel (0) target = $region17
    $region16: #{tpu_custom_call.1} parent=1 // pred_region
      _
    $region17: #{tpu_custom_call.1} parent=1 // pred_fallthru
      _
    // Predicated region
    $region18: #{tpu_custom_call.1} parent=1 // pred_check
      _
    $region19: #{tpu_custom_call.1} parent=1 // pred_check_branch
      %37 = sbr.rel (0) target = $region21
    $region20: #{tpu_custom_call.1} parent=1 // pred_region
      _
    $region21: #{tpu_custom_call.1} parent=1 // pred_fallthru
      _
    // Predicated region
    $region22: #{tpu_custom_call.1} parent=1 // pred_check
      _
    $region23: #{tpu_custom_call.1} parent=1 // pred_check_branch
      %39 = sbr.rel (0) target = $region25
    $region24: #{tpu_custom_call.1} parent=1 // pred_region
      _
    $region25: #{tpu_custom_call.1} parent=1 // pred_fallthru
      _
    // Predicated region
    $region26: #{tpu_custom_call.1} parent=1 // pred_check
      _
    $region27: #{tpu_custom_call.1} parent=1 // pred_check_branch
      %41 = sbr.rel (0) target = $region29
    $region28: #{tpu_custom_call.1} parent=1 // pred_region
      %43 = dma.done [#allocation3], 512
    $region29: #{tpu_custom_call.1} parent=1 // pred_fallthru
      _
    %v44 = vld [vmem:[%s0] sm:$0xff]
    %v45 = vld [vmem:[%s0 + $0x8] sm:$0xff]
    %v46 = vld [vmem:[%s0 + $0x10] sm:$0xff]
    %v47 = vld [vmem:[%s0 + $0x18] sm:$0xff]
    %v48 = vld [vmem:[#allocation2] sm:$0xff]
    %v49 = vld [vmem:[#allocation2 + $0x8] sm:$0xff]
    %v50 = vld [vmem:[#allocation2 + $0x10] sm:$0xff]
    %v51 = vld [vmem:[#allocation2 + $0x18] sm:$0xff]
    %v52 = vld [vmem:[%s2] sm:$0x1]
    %v54 = vperm.slane %v52, 0
    %vm56 = vcmask 261120
    %v58 = vsel %vm56, %v44, 0
    %v61 = vsel %vm56, %v45, 0
    %v64 = vsel %vm56, %v46, 0
    %v67 = vsel %vm56, %v47, 0
    %69 = vmatpush.msra.mxu0 0.0
    %70 = vmatpush.msra.mxu0 0.0
    %71 = vmatpush.msra.mxu0 0.0
    %72 = vmatpush.msra.mxu0 0.0
    %73 = vmatpush.msra.mxu0 0.0
    %74 = vmatpush.msra.mxu0 0.0
    %75 = vmatpush.msra.mxu0 0.0
    %76 = vmatpush.msra.mxu0 0.0
    %77 = vmatpush.msra.mxu0 0.0
    %78 = vmatpush.msra.mxu0 0.0
    %79 = vmatpush.msra.mxu0 0.0
    %80 = vmatpush.msra.mxu0 0.0
    %v81 = vand.u32 %v51, 4294901760
    %82 = vmatpush.msra.mxu0 %v81
    %v83 = vand.u32 %v50, 4294901760
    %84 = vmatpush.msra.mxu0 %v83
    %v85 = vand.u32 %v49, 4294901760
    %86 = vmatpush.msra.mxu0 %v85
    %v87 = vand.u32 %v48, 4294901760
    %88 = vmatpush.msra.mxu0 %v87
    %v89 = vand.u32 %v58, 4294901760
    %v90 = vsub.f32 %v58, %v89
    %v91 = vand.u32 %v90, 4294901760
    %v92 = vsub.f32 %v90, %v91
    %v93 = vand.u32 %v92, 4294901760
    %94 = vmatmul.f32.gmra.mxu0 %v93
    %v95 = vpop.f32.mrf.mxu0
    %v96 = vadd.f32 %v54, %v95
    %v97 = vand.u32 %v61, 4294901760
    %v98 = vsub.f32 %v61, %v97
    %v99 = vand.u32 %v98, 4294901760
    %v100 = vsub.f32 %v98, %v99
    %v101 = vand.u32 %v100, 4294901760
    %102 = vmatmul.f32.gmra.mxu0 %v101
    %v103 = vpop.f32.mrf.mxu0
    %v104 = vadd.f32 %v54, %v103
    %v105 = vand.u32 %v64, 4294901760
    %v106 = vsub.f32 %v64, %v105
    %v107 = vand.u32 %v106, 4294901760
    %v108 = vsub.f32 %v106, %v107
    %v109 = vand.u32 %v108, 4294901760
    %110 = vmatmul.f32.gmra.mxu0 %v109
    %v111 = vpop.f32.mrf.mxu0
    %v112 = vadd.f32 %v54, %v111
    %v113 = vand.u32 %v67, 4294901760
    %v114 = vsub.f32 %v67, %v113
    %v115 = vand.u32 %v114, 4294901760
    %v116 = vsub.f32 %v114, %v115
    %v117 = vand.u32 %v116, 4294901760
    %118 = vmatmul.f32.gmra.mxu0 %v117
    %v119 = vpop.f32.mrf.mxu0
    %v120 = vadd.f32 %v54, %v119
    %121 = vdwg.mxu0
    %122 = vmatpush.msra.mxu0 0.0
    %123 = vmatpush.msra.mxu0 0.0
    %124 = vmatpush.msra.mxu0 0.0
    %125 = vmatpush.msra.mxu0 0.0
    %126 = vmatpush.msra.mxu0 0.0
    %127 = vmatpush.msra.mxu0 0.0
    %128 = vmatpush.msra.mxu0 0.0
    %129 = vmatpush.msra.mxu0 0.0
    %130 = vmatpush.msra.mxu0 0.0
    %131 = vmatpush.msra.mxu0 0.0
    %132 = vmatpush.msra.mxu0 0.0
    %133 = vmatpush.msra.mxu0 0.0
    %v134 = vand.u32 %v51, 4294901760
    %v135 = vsub.f32 %v51, %v134
    %v136 = vand.u32 %v135, 4294901760
    %v137 = vsub.f32 %v135, %v136
    %v138 = vand.u32 %v137, 4294901760
    %139 = vmatpush.msra.mxu0 %v138
    %v140 = vand.u32 %v50, 4294901760
    %v141 = vsub.f32 %v50, %v140
    %v142 = vand.u32 %v141, 4294901760
    %v143 = vsub.f32 %v141, %v142
    %v144 = vand.u32 %v143, 4294901760
    %145 = vmatpush.msra.mxu0 %v144
    %v146 = vand.u32 %v49, 4294901760
    %v147 = vsub.f32 %v49, %v146
    %v148 = vand.u32 %v147, 4294901760
    %v149 = vsub.f32 %v147, %v148
    %v150 = vand.u32 %v149, 4294901760
    %151 = vmatpush.msra.mxu0 %v150
    %v152 = vand.u32 %v48, 4294901760
    %v153 = vsub.f32 %v48, %v152
    %v154 = vand.u32 %v153, 4294901760
    %v155 = vsub.f32 %v153, %v154
    %v156 = vand.u32 %v155, 4294901760
    %157 = vmatpush.msra.mxu0 %v156
    %v158 = vand.u32 %v58, 4294901760
    %159 = vmatmul.f32.gmra.mxu0 %v158
    %v160 = vpop.f32.mrf.mxu0
    %v161 = vadd.f32 %v96, %v160
    %v162 = vand.u32 %v61, 4294901760
    %163 = vmatmul.f32.gmra.mxu0 %v162
    %v164 = vpop.f32.mrf.mxu0
    %v165 = vadd.f32 %v104, %v164
    %v166 = vand.u32 %v64, 4294901760
    %167 = vmatmul.f32.gmra.mxu0 %v166
    %v168 = vpop.f32.mrf.mxu0
    %v169 = vadd.f32 %v112, %v168
    %v170 = vand.u32 %v67, 4294901760
    %171 = vmatmul.f32.gmra.mxu0 %v170
    %v172 = vpop.f32.mrf.mxu0
    %v173 = vadd.f32 %v120, %v172
    %174 = vdwg.mxu0
    %175 = vmatpush.msra.mxu0 0.0
    %176 = vmatpush.msra.mxu0 0.0
    %177 = vmatpush.msra.mxu0 0.0
    %178 = vmatpush.msra.mxu0 0.0
    %179 = vmatpush.msra.mxu0 0.0
    %180 = vmatpush.msra.mxu0 0.0
    %181 = vmatpush.msra.mxu0 0.0
    %182 = vmatpush.msra.mxu0 0.0
    %183 = vmatpush.msra.mxu0 0.0
    %184 = vmatpush.msra.mxu0 0.0
    %185 = vmatpush.msra.mxu0 0.0
    %186 = vmatpush.msra.mxu0 0.0
    %v187 = vand.u32 %v51, 4294901760
    %v188 = vsub.f32 %v51, %v187
    %189 = vmatpush.msra.mxu0 %v188
    %v190 = vand.u32 %v50, 4294901760
    %v191 = vsub.f32 %v50, %v190
    %192 = vmatpush.msra.mxu0 %v191
    %v193 = vand.u32 %v49, 4294901760
    %v194 = vsub.f32 %v49, %v193
    %195 = vmatpush.msra.mxu0 %v194
    %v196 = vand.u32 %v48, 4294901760
    %v197 = vsub.f32 %v48, %v196
    %198 = vmatpush.msra.mxu0 %v197
    %v199 = vand.u32 %v58, 4294901760
    %v200 = vsub.f32 %v58, %v199
    %201 = vmatmul.f32.gmra.mxu0 %v200
    %v202 = vpop.f32.mrf.mxu0
    %v203 = vadd.f32 %v161, %v202
    %v204 = vand.u32 %v61, 4294901760
    %v205 = vsub.f32 %v61, %v204
    %206 = vmatmul.f32.gmra.mxu0 %v205
    %v207 = vpop.f32.mrf.mxu0
    %v208 = vadd.f32 %v165, %v207
    %v209 = vand.u32 %v64, 4294901760
    %v210 = vsub.f32 %v64, %v209
    %211 = vmatmul.f32.gmra.mxu0 %v210
    %v212 = vpop.f32.mrf.mxu0
    %v213 = vadd.f32 %v169, %v212
    %v214 = vand.u32 %v67, 4294901760
    %v215 = vsub.f32 %v67, %v214
    %216 = vmatmul.f32.gmra.mxu0 %v215
    %v217 = vpop.f32.mrf.mxu0
    %v218 = vadd.f32 %v173, %v217
    %219 = vdwg.mxu0
    %220 = vmatpush.msra.mxu0 0.0
    %221 = vmatpush.msra.mxu0 0.0
    %222 = vmatpush.msra.mxu0 0.0
    %223 = vmatpush.msra.mxu0 0.0
    %224 = vmatpush.msra.mxu0 0.0
    %225 = vmatpush.msra.mxu0 0.0
    %226 = vmatpush.msra.mxu0 0.0
    %227 = vmatpush.msra.mxu0 0.0
    %228 = vmatpush.msra.mxu0 0.0
    %229 = vmatpush.msra.mxu0 0.0
    %230 = vmatpush.msra.mxu0 0.0
    %231 = vmatpush.msra.mxu0 0.0
    %v232 = vand.u32 %v51, 4294901760
    %233 = vmatpush.msra.mxu0 %v232
    %v234 = vand.u32 %v50, 4294901760
    %235 = vmatpush.msra.mxu0 %v234
    %v236 = vand.u32 %v49, 4294901760
    %237 = vmatpush.msra.mxu0 %v236
    %v238 = vand.u32 %v48, 4294901760
    %239 = vmatpush.msra.mxu0 %v238
    %v240 = vand.u32 %v58, 4294901760
    %v241 = vsub.f32 %v58, %v240
    %v242 = vand.u32 %v241, 4294901760
    %243 = vmatmul.f32.gmra.mxu0 %v242
    %v244 = vpop.f32.mrf.mxu0
    %v245 = vadd.f32 %v203, %v244
    %v246 = vand.u32 %v61, 4294901760
    %v247 = vsub.f32 %v61, %v246
    %v248 = vand.u32 %v247, 4294901760
    %249 = vmatmul.f32.gmra.mxu0 %v248
    %v250 = vpop.f32.mrf.mxu0
    %v251 = vadd.f32 %v208, %v250
    %v252 = vand.u32 %v64, 4294901760
    %v253 = vsub.f32 %v64, %v252
    %v254 = vand.u32 %v253, 4294901760
    %255 = vmatmul.f32.gmra.mxu0 %v254
    %v256 = vpop.f32.mrf.mxu0
    %v257 = vadd.f32 %v213, %v256
    %v258 = vand.u32 %v67, 4294901760
    %v259 = vsub.f32 %v67, %v258
    %v260 = vand.u32 %v259, 4294901760
    %261 = vmatmul.f32.gmra.mxu0 %v260
    %v262 = vpop.f32.mrf.mxu0
    %v263 = vadd.f32 %v218, %v262
    %264 = vdwg.mxu0
    %265 = vmatpush.msra.mxu0 0.0
    %266 = vmatpush.msra.mxu0 0.0
    %267 = vmatpush.msra.mxu0 0.0
    %268 = vmatpush.msra.mxu0 0.0
    %269 = vmatpush.msra.mxu0 0.0
    %270 = vmatpush.msra.mxu0 0.0
    %271 = vmatpush.msra.mxu0 0.0
    %272 = vmatpush.msra.mxu0 0.0
    %273 = vmatpush.msra.mxu0 0.0
    %274 = vmatpush.msra.mxu0 0.0
    %275 = vmatpush.msra.mxu0 0.0
    %276 = vmatpush.msra.mxu0 0.0
    %v277 = vand.u32 %v51, 4294901760
    %v278 = vsub.f32 %v51, %v277
    %v279 = vand.u32 %v278, 4294901760
    %280 = vmatpush.msra.mxu0 %v279
    %v281 = vand.u32 %v50, 4294901760
    %v282 = vsub.f32 %v50, %v281
    %v283 = vand.u32 %v282, 4294901760
    %284 = vmatpush.msra.mxu0 %v283
    %v285 = vand.u32 %v49, 4294901760
    %v286 = vsub.f32 %v49, %v285
    %v287 = vand.u32 %v286, 4294901760
    %288 = vmatpush.msra.mxu0 %v287
    %v289 = vand.u32 %v48, 4294901760
    %v290 = vsub.f32 %v48, %v289
    %v291 = vand.u32 %v290, 4294901760
    %292 = vmatpush.msra.mxu0 %v291
    %v293 = vand.u32 %v58, 4294901760
    %294 = vmatmul.f32.gmra.mxu0 %v293
    %v295 = vpop.f32.mrf.mxu0
    %v296 = vadd.f32 %v245, %v295
    %v297 = vand.u32 %v61, 4294901760
    %298 = vmatmul.f32.gmra.mxu0 %v297
    %v299 = vpop.f32.mrf.mxu0
    %v300 = vadd.f32 %v251, %v299
    %v301 = vand.u32 %v64, 4294901760
    %302 = vmatmul.f32.gmra.mxu0 %v301
    %v303 = vpop.f32.mrf.mxu0
    %v304 = vadd.f32 %v257, %v303
    %v305 = vand.u32 %v67, 4294901760
    %306 = vmatmul.f32.gmra.mxu0 %v305
    %v307 = vpop.f32.mrf.mxu0
    %v308 = vadd.f32 %v263, %v307
    %309 = vdwg.mxu0
    %310 = vmatpush.msra.mxu0 0.0
    %311 = vmatpush.msra.mxu0 0.0
    %312 = vmatpush.msra.mxu0 0.0
    %313 = vmatpush.msra.mxu0 0.0
    %314 = vmatpush.msra.mxu0 0.0
    %315 = vmatpush.msra.mxu0 0.0
    %316 = vmatpush.msra.mxu0 0.0
    %317 = vmatpush.msra.mxu0 0.0
    %318 = vmatpush.msra.mxu0 0.0
    %319 = vmatpush.msra.mxu0 0.0
    %320 = vmatpush.msra.mxu0 0.0
    %321 = vmatpush.msra.mxu0 0.0
    %v322 = vand.u32 %v51, 4294901760
    %323 = vmatpush.msra.mxu0 %v322
    %v324 = vand.u32 %v50, 4294901760
    %325 = vmatpush.msra.mxu0 %v324
    %v326 = vand.u32 %v49, 4294901760
    %327 = vmatpush.msra.mxu0 %v326
    %v328 = vand.u32 %v48, 4294901760
    %329 = vmatpush.msra.mxu0 %v328
    %v330 = vand.u32 %v58, 4294901760
    %331 = vmatmul.f32.gmra.mxu0 %v330
    %v332 = vpop.f32.mrf.mxu0
    %v333 = vadd.f32 %v296, %v332
    %v334 = vand.u32 %v61, 4294901760
    %335 = vmatmul.f32.gmra.mxu0 %v334
    %v336 = vpop.f32.mrf.mxu0
    %v337 = vadd.f32 %v300, %v336
    %v338 = vand.u32 %v64, 4294901760
    %339 = vmatmul.f32.gmra.mxu0 %v338
    %v340 = vpop.f32.mrf.mxu0
    %v341 = vadd.f32 %v304, %v340
    %v342 = vand.u32 %v67, 4294901760
    %343 = vmatmul.f32.gmra.mxu0 %v342
    %v344 = vpop.f32.mrf.mxu0
    %v345 = vadd.f32 %v308, %v344
    %346 = vdwg.mxu0
    %v347 = vld [vmem:[%s5] sm:$0xff]
    %v348 = vld [vmem:[%s5 + $0x8] sm:$0xff]
    %v349 = vld [vmem:[%s5 + $0x10] sm:$0xff]
    %v350 = vld [vmem:[%s5 + $0x18] sm:$0xff]
    %v351 = vmul.f32 %v333, %v333
    %v352 = vmul.f32 %v337, %v337
    %v353 = vmul.f32 %v341, %v341
    %v354 = vmul.f32 %v345, %v345
    %v356 = vsel %vm56, %v351, 0
    %v359 = vsel %vm56, %v352, 0
    %v362 = vsel %vm56, %v353, 0
    %v365 = vsel %vm56, %v354, 0
    %367 = vmatpush.msra.mxu0 0.0
    %368 = vmatpush.msra.mxu0 0.0
    %369 = vmatpush.msra.mxu0 0.0
    %370 = vmatpush.msra.mxu0 0.0
    %371 = vmatpush.msra.mxu0 0.0
    %372 = vmatpush.msra.mxu0 0.0
    %373 = vmatpush.msra.mxu0 0.0
    %374 = vmatpush.msra.mxu0 0.0
    %375 = vmatpush.msra.mxu0 0.0
    %376 = vmatpush.msra.mxu0 0.0
    %377 = vmatpush.msra.mxu0 0.0
    %378 = vmatpush.msra.mxu0 0.0
    %v379 = vand.u32 %v350, 4294901760
    %380 = vmatpush.msra.mxu0 %v379
    %v381 = vand.u32 %v349, 4294901760
    %382 = vmatpush.msra.mxu0 %v381
    %v383 = vand.u32 %v348, 4294901760
    %384 = vmatpush.msra.mxu0 %v383
    %v385 = vand.u32 %v347, 4294901760
    %386 = vmatpush.msra.mxu0 %v385
    %v387 = vand.u32 %v356, 4294901760
    %v388 = vsub.f32 %v356, %v387
    %v389 = vand.u32 %v388, 4294901760
    %v390 = vsub.f32 %v388, %v389
    %v391 = vand.u32 %v390, 4294901760
    %392 = vmatmul.f32.gmra.mxu0 %v391
    %v393 = vpop.f32.mrf.mxu0
    %v394 = vadd.f32 0.0, %v393
    %v395 = vand.u32 %v359, 4294901760
    %v396 = vsub.f32 %v359, %v395
    %v397 = vand.u32 %v396, 4294901760
    %v398 = vsub.f32 %v396, %v397
    %v399 = vand.u32 %v398, 4294901760
    %400 = vmatmul.f32.gmra.mxu0 %v399
    %v401 = vpop.f32.mrf.mxu0
    %v402 = vadd.f32 0.0, %v401
    %v403 = vand.u32 %v362, 4294901760
    %v404 = vsub.f32 %v362, %v403
    %v405 = vand.u32 %v404, 4294901760
    %v406 = vsub.f32 %v404, %v405
    %v407 = vand.u32 %v406, 4294901760
    %408 = vmatmul.f32.gmra.mxu0 %v407
    %v409 = vpop.f32.mrf.mxu0
    %v410 = vadd.f32 0.0, %v409
    %v411 = vand.u32 %v365, 4294901760
    %v412 = vsub.f32 %v365, %v411
    %v413 = vand.u32 %v412, 4294901760
    %v414 = vsub.f32 %v412, %v413
    %v415 = vand.u32 %v414, 4294901760
    %416 = vmatmul.f32.gmra.mxu0 %v415
    %v417 = vpop.f32.mrf.mxu0
    %v418 = vadd.f32 0.0, %v417
    %419 = vdwg.mxu0
    %420 = vmatpush.msra.mxu0 0.0
    %421 = vmatpush.msra.mxu0 0.0
    %422 = vmatpush.msra.mxu0 0.0
    %423 = vmatpush.msra.mxu0 0.0
    %424 = vmatpush.msra.mxu0 0.0
    %425 = vmatpush.msra.mxu0 0.0
    %426 = vmatpush.msra.mxu0 0.0
    %427 = vmatpush.msra.mxu0 0.0
    %428 = vmatpush.msra.mxu0 0.0
    %429 = vmatpush.msra.mxu0 0.0
    %430 = vmatpush.msra.mxu0 0.0
    %431 = vmatpush.msra.mxu0 0.0
    %v432 = vand.u32 %v350, 4294901760
    %v433 = vsub.f32 %v350, %v432
    %v434 = vand.u32 %v433, 4294901760
    %v435 = vsub.f32 %v433, %v434
    %v436 = vand.u32 %v435, 4294901760
    %437 = vmatpush.msra.mxu0 %v436
    %v438 = vand.u32 %v349, 4294901760
    %v439 = vsub.f32 %v349, %v438
    %v440 = vand.u32 %v439, 4294901760
    %v441 = vsub.f32 %v439, %v440
    %v442 = vand.u32 %v441, 4294901760
    %443 = vmatpush.msra.mxu0 %v442
    %v444 = vand.u32 %v348, 4294901760
    %v445 = vsub.f32 %v348, %v444
    %v446 = vand.u32 %v445, 4294901760
    %v447 = vsub.f32 %v445, %v446
    %v448 = vand.u32 %v447, 4294901760
    %449 = vmatpush.msra.mxu0 %v448
    %v450 = vand.u32 %v347, 4294901760
    %v451 = vsub.f32 %v347, %v450
    %v452 = vand.u32 %v451, 4294901760
    %v453 = vsub.f32 %v451, %v452
    %v454 = vand.u32 %v453, 4294901760
    %455 = vmatpush.msra.mxu0 %v454
    %v456 = vand.u32 %v356, 4294901760
    %457 = vmatmul.f32.gmra.mxu0 %v456
    %v458 = vpop.f32.mrf.mxu0
    %v459 = vadd.f32 %v394, %v458
    %v460 = vand.u32 %v359, 4294901760
    %461 = vmatmul.f32.gmra.mxu0 %v460
    %v462 = vpop.f32.mrf.mxu0
    %v463 = vadd.f32 %v402, %v462
    %v464 = vand.u32 %v362, 4294901760
    %465 = vmatmul.f32.gmra.mxu0 %v464
    %v466 = vpop.f32.mrf.mxu0
    %v467 = vadd.f32 %v410, %v466
    %v468 = vand.u32 %v365, 4294901760
    %469 = vmatmul.f32.gmra.mxu0 %v468
    %v470 = vpop.f32.mrf.mxu0
    %v471 = vadd.f32 %v418, %v470
    %472 = vdwg.mxu0
    %473 = vmatpush.msra.mxu0 0.0
    %474 = vmatpush.msra.mxu0 0.0
    %475 = vmatpush.msra.mxu0 0.0
    %476 = vmatpush.msra.mxu0 0.0
    %477 = vmatpush.msra.mxu0 0.0
    %478 = vmatpush.msra.mxu0 0.0
    %479 = vmatpush.msra.mxu0 0.0
    %480 = vmatpush.msra.mxu0 0.0
    %481 = vmatpush.msra.mxu0 0.0
    %482 = vmatpush.msra.mxu0 0.0
    %483 = vmatpush.msra.mxu0 0.0
    %484 = vmatpush.msra.mxu0 0.0
    %v485 = vand.u32 %v350, 4294901760
    %v486 = vsub.f32 %v350, %v485
    %487 = vmatpush.msra.mxu0 %v486
    %v488 = vand.u32 %v349, 4294901760
    %v489 = vsub.f32 %v349, %v488
    %490 = vmatpush.msra.mxu0 %v489
    %v491 = vand.u32 %v348, 4294901760
    %v492 = vsub.f32 %v348, %v491
    %493 = vmatpush.msra.mxu0 %v492
    %v494 = vand.u32 %v347, 4294901760
    %v495 = vsub.f32 %v347, %v494
    %496 = vmatpush.msra.mxu0 %v495
    %v497 = vand.u32 %v356, 4294901760
    %v498 = vsub.f32 %v356, %v497
    %499 = vmatmul.f32.gmra.mxu0 %v498
    %v500 = vpop.f32.mrf.mxu0
    %v501 = vadd.f32 %v459, %v500
    %v502 = vand.u32 %v359, 4294901760
    %v503 = vsub.f32 %v359, %v502
    %504 = vmatmul.f32.gmra.mxu0 %v503
    %v505 = vpop.f32.mrf.mxu0
    %v506 = vadd.f32 %v463, %v505
    %v507 = vand.u32 %v362, 4294901760
    %v508 = vsub.f32 %v362, %v507
    %509 = vmatmul.f32.gmra.mxu0 %v508
    %v510 = vpop.f32.mrf.mxu0
    %v511 = vadd.f32 %v467, %v510
    %v512 = vand.u32 %v365, 4294901760
    %v513 = vsub.f32 %v365, %v512
    %514 = vmatmul.f32.gmra.mxu0 %v513
    %v515 = vpop.f32.mrf.mxu0
    %v516 = vadd.f32 %v471, %v515
    %517 = vdwg.mxu0
    %518 = vmatpush.msra.mxu0 0.0
    %519 = vmatpush.msra.mxu0 0.0
    %520 = vmatpush.msra.mxu0 0.0
    %521 = vmatpush.msra.mxu0 0.0
    %522 = vmatpush.msra.mxu0 0.0
    %523 = vmatpush.msra.mxu0 0.0
    %524 = vmatpush.msra.mxu0 0.0
    %525 = vmatpush.msra.mxu0 0.0
    %526 = vmatpush.msra.mxu0 0.0
    %527 = vmatpush.msra.mxu0 0.0
    %528 = vmatpush.msra.mxu0 0.0
    %529 = vmatpush.msra.mxu0 0.0
    %v530 = vand.u32 %v350, 4294901760
    %531 = vmatpush.msra.mxu0 %v530
    %v532 = vand.u32 %v349, 4294901760
    %533 = vmatpush.msra.mxu0 %v532
    %v534 = vand.u32 %v348, 4294901760
    %535 = vmatpush.msra.mxu0 %v534
    %v536 = vand.u32 %v347, 4294901760
    %537 = vmatpush.msra.mxu0 %v536
    %v538 = vand.u32 %v356, 4294901760
    %v539 = vsub.f32 %v356, %v538
    %v540 = vand.u32 %v539, 4294901760
    %541 = vmatmul.f32.gmra.mxu0 %v540
    %v542 = vpop.f32.mrf.mxu0
    %v543 = vadd.f32 %v501, %v542
    %v544 = vand.u32 %v359, 4294901760
    %v545 = vsub.f32 %v359, %v544
    %v546 = vand.u32 %v545, 4294901760
    %547 = vmatmul.f32.gmra.mxu0 %v546
    %v548 = vpop.f32.mrf.mxu0
    %v549 = vadd.f32 %v506, %v548
    %v550 = vand.u32 %v362, 4294901760
    %v551 = vsub.f32 %v362, %v550
    %v552 = vand.u32 %v551, 4294901760
    %553 = vmatmul.f32.gmra.mxu0 %v552
    %v554 = vpop.f32.mrf.mxu0
    %v555 = vadd.f32 %v511, %v554
    %v556 = vand.u32 %v365, 4294901760
    %v557 = vsub.f32 %v365, %v556
    %v558 = vand.u32 %v557, 4294901760
    %559 = vmatmul.f32.gmra.mxu0 %v558
    %v560 = vpop.f32.mrf.mxu0
    %v561 = vadd.f32 %v516, %v560
    %562 = vdwg.mxu0
    %563 = vmatpush.msra.mxu0 0.0
    %564 = vmatpush.msra.mxu0 0.0
    %565 = vmatpush.msra.mxu0 0.0
    %566 = vmatpush.msra.mxu0 0.0
    %567 = vmatpush.msra.mxu0 0.0
    %568 = vmatpush.msra.mxu0 0.0
    %569 = vmatpush.msra.mxu0 0.0
    %570 = vmatpush.msra.mxu0 0.0
    %571 = vmatpush.msra.mxu0 0.0
    %572 = vmatpush.msra.mxu0 0.0
    %573 = vmatpush.msra.mxu0 0.0
    %574 = vmatpush.msra.mxu0 0.0
    %v575 = vand.u32 %v350, 4294901760
    %v576 = vsub.f32 %v350, %v575
    %v577 = vand.u32 %v576, 4294901760
    %578 = vmatpush.msra.mxu0 %v577
    %v579 = vand.u32 %v349, 4294901760
    %v580 = vsub.f32 %v349, %v579
    %v581 = vand.u32 %v580, 4294901760
    %582 = vmatpush.msra.mxu0 %v581
    %v583 = vand.u32 %v348, 4294901760
    %v584 = vsub.f32 %v348, %v583
    %v585 = vand.u32 %v584, 4294901760
    %586 = vmatpush.msra.mxu0 %v585
    %v587 = vand.u32 %v347, 4294901760
    %v588 = vsub.f32 %v347, %v587
    %v589 = vand.u32 %v588, 4294901760
    %590 = vmatpush.msra.mxu0 %v589
    %v591 = vand.u32 %v356, 4294901760
    %592 = vmatmul.f32.gmra.mxu0 %v591
    %v593 = vpop.f32.mrf.mxu0
    %v594 = vadd.f32 %v543, %v593
    %v595 = vand.u32 %v359, 4294901760
    %596 = vmatmul.f32.gmra.mxu0 %v595
    %v597 = vpop.f32.mrf.mxu0
    %v598 = vadd.f32 %v549, %v597
    %v599 = vand.u32 %v362, 4294901760
    %600 = vmatmul.f32.gmra.mxu0 %v599
    %v601 = vpop.f32.mrf.mxu0
    %v602 = vadd.f32 %v555, %v601
    %v603 = vand.u32 %v365, 4294901760
    %604 = vmatmul.f32.gmra.mxu0 %v603
    %v605 = vpop.f32.mrf.mxu0
    %v606 = vadd.f32 %v561, %v605
    %607 = vdwg.mxu0
    %608 = vmatpush.msra.mxu0 0.0
    %609 = vmatpush.msra.mxu0 0.0
    %610 = vmatpush.msra.mxu0 0.0
    %611 = vmatpush.msra.mxu0 0.0
    %612 = vmatpush.msra.mxu0 0.0
    %613 = vmatpush.msra.mxu0 0.0
    %614 = vmatpush.msra.mxu0 0.0
    %615 = vmatpush.msra.mxu0 0.0
    %616 = vmatpush.msra.mxu0 0.0
    %617 = vmatpush.msra.mxu0 0.0
    %618 = vmatpush.msra.mxu0 0.0
    %619 = vmatpush.msra.mxu0 0.0
    %v620 = vand.u32 %v350, 4294901760
    %621 = vmatpush.msra.mxu0 %v620
    %v622 = vand.u32 %v349, 4294901760
    %623 = vmatpush.msra.mxu0 %v622
    %v624 = vand.u32 %v348, 4294901760
    %625 = vmatpush.msra.mxu0 %v624
    %v626 = vand.u32 %v347, 4294901760
    %627 = vmatpush.msra.mxu0 %v626
    %v628 = vand.u32 %v356, 4294901760
    %629 = vmatmul.f32.gmra.mxu0 %v628
    %v630 = vpop.f32.mrf.mxu0
    %v631 = vadd.f32 %v594, %v630
    %v632 = vand.u32 %v359, 4294901760
    %633 = vmatmul.f32.gmra.mxu0 %v632
    %v634 = vpop.f32.mrf.mxu0
    %v635 = vadd.f32 %v598, %v634
    %v636 = vand.u32 %v362, 4294901760
    %637 = vmatmul.f32.gmra.mxu0 %v636
    %v638 = vpop.f32.mrf.mxu0
    %v639 = vadd.f32 %v602, %v638
    %v640 = vand.u32 %v365, 4294901760
    %641 = vmatmul.f32.gmra.mxu0 %v640
    %v642 = vpop.f32.mrf.mxu0
    %v643 = vadd.f32 %v606, %v642
    %644 = vdwg.mxu0
    %v645 = vmul.f32 %v631, 0.0625
    %v646 = vmul.f32 %v635, 0.0625
    %v647 = vmul.f32 %v639, 0.0625
    %v648 = vmul.f32 %v643, 0.0625
    %v649 = vadd.f32 %v645, 1e-06
    %v650 = vadd.f32 %v646, 1e-06
    %v651 = vadd.f32 %v647, 1e-06
    %v652 = vadd.f32 %v648, 1e-06
    %v653 = vrsqrt.pop %v649
    %v654 = vmul.f32 %v653, %v649
    %v655 = vmul.f32 %v654, %v653
    %v656 = vmul.f32 0.5, %v655
    %v657 = vsub.f32 1.5, %v656
    %v658 = vmul.f32 %v653, %v657
    %vm659 = vweird.f32 %v649
    %vm660 = vweird.f32 %v653
    %vm661 = vmor %vm659, %vm660
    %v662 = vsel %vm661, %v653, %v658
    %v663 = vrsqrt.pop %v650
    %v664 = vmul.f32 %v663, %v650
    %v665 = vmul.f32 %v664, %v663
    %v666 = vmul.f32 0.5, %v665
    %v667 = vsub.f32 1.5, %v666
    %v668 = vmul.f32 %v663, %v667
    %vm669 = vweird.f32 %v650
    %vm670 = vweird.f32 %v663
    %vm671 = vmor %vm669, %vm670
    %v672 = vsel %vm671, %v663, %v668
    %v673 = vrsqrt.pop %v651
    %v674 = vmul.f32 %v673, %v651
    %v675 = vmul.f32 %v674, %v673
    %v676 = vmul.f32 0.5, %v675
    %v677 = vsub.f32 1.5, %v676
    %v678 = vmul.f32 %v673, %v677
    %vm679 = vweird.f32 %v651
    %vm680 = vweird.f32 %v673
    %vm681 = vmor %vm679, %vm680
    %v682 = vsel %vm681, %v673, %v678
    %v683 = vrsqrt.pop %v652
    %v684 = vmul.f32 %v683, %v652
    %v685 = vmul.f32 %v684, %v683
    %v686 = vmul.f32 0.5, %v685
    %v687 = vsub.f32 1.5, %v686
    %v688 = vmul.f32 %v683, %v687
    %vm689 = vweird.f32 %v652
    %vm690 = vweird.f32 %v683
    %vm691 = vmor %vm689, %vm690
    %v692 = vsel %vm691, %v683, %v688
    %vm693 = vcmask 15360
    %v695 = vsel %vm693, %v662, 0
    %v698 = vsel %vm693, %v672, 0
    %v701 = vsel %vm693, %v682, 0
    %v704 = vsel %vm693, %v692, 0
    %v707 = vsel %vm693, %v347, 0
    %v710 = vsel %vm693, %v348, 0
    %v713 = vsel %vm693, %v349, 0
    %v716 = vsel %vm693, %v350, 0
    %718 = vmatpush.xpose.msra.mxu0 0.0
    %719 = vmatpush.xpose.msra.mxu0 0.0
    %720 = vmatpush.xpose.msra.mxu0 0.0
    %721 = vmatpush.xpose.msra.mxu0 0.0
    %722 = vmatpush.xpose.msra.mxu0 0.0
    %723 = vmatpush.xpose.msra.mxu0 0.0
    %724 = vmatpush.xpose.msra.mxu0 0.0
    %725 = vmatpush.xpose.msra.mxu0 0.0
    %726 = vmatpush.xpose.msra.mxu0 0.0
    %727 = vmatpush.xpose.msra.mxu0 0.0
    %728 = vmatpush.xpose.msra.mxu0 0.0
    %729 = vmatpush.xpose.msra.mxu0 0.0
    %v730 = vand.u32 %v716, 4294901760
    %731 = vmatpush.xpose.msra.mxu0 %v730
    %v732 = vand.u32 %v713, 4294901760
    %733 = vmatpush.xpose.msra.mxu0 %v732
    %v734 = vand.u32 %v710, 4294901760
    %735 = vmatpush.xpose.msra.mxu0 %v734
    %v736 = vand.u32 %v707, 4294901760
    %737 = vmatpush.xpose.msra.mxu0 %v736
    %v738 = vand.u32 %v695, 4294901760
    %v739 = vsub.f32 %v695, %v738
    %v740 = vand.u32 %v739, 4294901760
    %v741 = vsub.f32 %v739, %v740
    %v742 = vand.u32 %v741, 4294901760
    %743 = vmatmul.f32.gmra.mxu0 %v742
    %v744 = vpop.f32.mrf.mxu0
    %v745 = vadd.f32 0.0, %v744
    %v746 = vand.u32 %v698, 4294901760
    %v747 = vsub.f32 %v698, %v746
    %v748 = vand.u32 %v747, 4294901760
    %v749 = vsub.f32 %v747, %v748
    %v750 = vand.u32 %v749, 4294901760
    %751 = vmatmul.f32.gmra.mxu0 %v750
    %v752 = vpop.f32.mrf.mxu0
    %v753 = vadd.f32 0.0, %v752
    %v754 = vand.u32 %v701, 4294901760
    %v755 = vsub.f32 %v701, %v754
    %v756 = vand.u32 %v755, 4294901760
    %v757 = vsub.f32 %v755, %v756
    %v758 = vand.u32 %v757, 4294901760
    %759 = vmatmul.f32.gmra.mxu0 %v758
    %v760 = vpop.f32.mrf.mxu0
    %v761 = vadd.f32 0.0, %v760
    %v762 = vand.u32 %v704, 4294901760
    %v763 = vsub.f32 %v704, %v762
    %v764 = vand.u32 %v763, 4294901760
    %v765 = vsub.f32 %v763, %v764
    %v766 = vand.u32 %v765, 4294901760
    %767 = vmatmul.f32.gmra.mxu0 %v766
    %v768 = vpop.f32.mrf.mxu0
    %v769 = vadd.f32 0.0, %v768
    %770 = vdwg.mxu0
    %771 = vmatpush.xpose.msra.mxu0 0.0
    %772 = vmatpush.xpose.msra.mxu0 0.0
    %773 = vmatpush.xpose.msra.mxu0 0.0
    %774 = vmatpush.xpose.msra.mxu0 0.0
    %775 = vmatpush.xpose.msra.mxu0 0.0
    %776 = vmatpush.xpose.msra.mxu0 0.0
    %777 = vmatpush.xpose.msra.mxu0 0.0
    %778 = vmatpush.xpose.msra.mxu0 0.0
    %779 = vmatpush.xpose.msra.mxu0 0.0
    %780 = vmatpush.xpose.msra.mxu0 0.0
    %781 = vmatpush.xpose.msra.mxu0 0.0
    %782 = vmatpush.xpose.msra.mxu0 0.0
    %v783 = vand.u32 %v716, 4294901760
    %v784 = vsub.f32 %v716, %v783
    %v785 = vand.u32 %v784, 4294901760
    %v786 = vsub.f32 %v784, %v785
    %v787 = vand.u32 %v786, 4294901760
    %788 = vmatpush.xpose.msra.mxu0 %v787
    %v789 = vand.u32 %v713, 4294901760
    %v790 = vsub.f32 %v713, %v789
    %v791 = vand.u32 %v790, 4294901760
    %v792 = vsub.f32 %v790, %v791
    %v793 = vand.u32 %v792, 4294901760
    %794 = vmatpush.xpose.msra.mxu0 %v793
    %v795 = vand.u32 %v710, 4294901760
    %v796 = vsub.f32 %v710, %v795
    %v797 = vand.u32 %v796, 4294901760
    %v798 = vsub.f32 %v796, %v797
    %v799 = vand.u32 %v798, 4294901760
    %800 = vmatpush.xpose.msra.mxu0 %v799
    %v801 = vand.u32 %v707, 4294901760
    %v802 = vsub.f32 %v707, %v801
    %v803 = vand.u32 %v802, 4294901760
    %v804 = vsub.f32 %v802, %v803
    %v805 = vand.u32 %v804, 4294901760
    %806 = vmatpush.xpose.msra.mxu0 %v805
    %v807 = vand.u32 %v695, 4294901760
    %808 = vmatmul.f32.gmra.mxu0 %v807
    %v809 = vpop.f32.mrf.mxu0
    %v810 = vadd.f32 %v745, %v809
    %v811 = vand.u32 %v698, 4294901760
    %812 = vmatmul.f32.gmra.mxu0 %v811
    %v813 = vpop.f32.mrf.mxu0
    %v814 = vadd.f32 %v753, %v813
    %v815 = vand.u32 %v701, 4294901760
    %816 = vmatmul.f32.gmra.mxu0 %v815
    %v817 = vpop.f32.mrf.mxu0
    %v818 = vadd.f32 %v761, %v817
    %v819 = vand.u32 %v704, 4294901760
    %820 = vmatmul.f32.gmra.mxu0 %v819
    %v821 = vpop.f32.mrf.mxu0
    %v822 = vadd.f32 %v769, %v821
    %823 = vdwg.mxu0
    %824 = vmatpush.xpose.msra.mxu0 0.0
    %825 = vmatpush.xpose.msra.mxu0 0.0
    %826 = vmatpush.xpose.msra.mxu0 0.0
    %827 = vmatpush.xpose.msra.mxu0 0.0
    %828 = vmatpush.xpose.msra.mxu0 0.0
    %829 = vmatpush.xpose.msra.mxu0 0.0
    %830 = vmatpush.xpose.msra.mxu0 0.0
    %831 = vmatpush.xpose.msra.mxu0 0.0
    %832 = vmatpush.xpose.msra.mxu0 0.0
    %833 = vmatpush.xpose.msra.mxu0 0.0
    %834 = vmatpush.xpose.msra.mxu0 0.0
    %835 = vmatpush.xpose.msra.mxu0 0.0
    %v836 = vand.u32 %v716, 4294901760
    %v837 = vsub.f32 %v716, %v836
    %838 = vmatpush.xpose.msra.mxu0 %v837
    %v839 = vand.u32 %v713, 4294901760
    %v840 = vsub.f32 %v713, %v839
    %841 = vmatpush.xpose.msra.mxu0 %v840
    %v842 = vand.u32 %v710, 4294901760
    %v843 = vsub.f32 %v710, %v842
    %844 = vmatpush.xpose.msra.mxu0 %v843
    %v845 = vand.u32 %v707, 4294901760
    %v846 = vsub.f32 %v707, %v845
    %847 = vmatpush.xpose.msra.mxu0 %v846
    %v848 = vand.u32 %v695, 4294901760
    %v849 = vsub.f32 %v695, %v848
    %850 = vmatmul.f32.gmra.mxu0 %v849
    %v851 = vpop.f32.mrf.mxu0
    %v852 = vadd.f32 %v810, %v851
    %v853 = vand.u32 %v698, 4294901760
    %v854 = vsub.f32 %v698, %v853
    %855 = vmatmul.f32.gmra.mxu0 %v854
    %v856 = vpop.f32.mrf.mxu0
    %v857 = vadd.f32 %v814, %v856
    %v858 = vand.u32 %v701, 4294901760
    %v859 = vsub.f32 %v701, %v858
    %860 = vmatmul.f32.gmra.mxu0 %v859
    %v861 = vpop.f32.mrf.mxu0
    %v862 = vadd.f32 %v818, %v861
    %v863 = vand.u32 %v704, 4294901760
    %v864 = vsub.f32 %v704, %v863
    %865 = vmatmul.f32.gmra.mxu0 %v864
    %v866 = vpop.f32.mrf.mxu0
    %v867 = vadd.f32 %v822, %v866
    %868 = vdwg.mxu0
    %869 = vmatpush.xpose.msra.mxu0 0.0
    %870 = vmatpush.xpose.msra.mxu0 0.0
    %871 = vmatpush.xpose.msra.mxu0 0.0
    %872 = vmatpush.xpose.msra.mxu0 0.0
    %873 = vmatpush.xpose.msra.mxu0 0.0
    %874 = vmatpush.xpose.msra.mxu0 0.0
    %875 = vmatpush.xpose.msra.mxu0 0.0
    %876 = vmatpush.xpose.msra.mxu0 0.0
    %877 = vmatpush.xpose.msra.mxu0 0.0
    %878 = vmatpush.xpose.msra.mxu0 0.0
    %879 = vmatpush.xpose.msra.mxu0 0.0
    %880 = vmatpush.xpose.msra.mxu0 0.0
    %v881 = vand.u32 %v716, 4294901760
    %882 = vmatpush.xpose.msra.mxu0 %v881
    %v883 = vand.u32 %v713, 4294901760
    %884 = vmatpush.xpose.msra.mxu0 %v883
    %v885 = vand.u32 %v710, 4294901760
    %886 = vmatpush.xpose.msra.mxu0 %v885
    %v887 = vand.u32 %v707, 4294901760
    %888 = vmatpush.xpose.msra.mxu0 %v887
    %v889 = vand.u32 %v695, 4294901760
    %v890 = vsub.f32 %v695, %v889
    %v891 = vand.u32 %v890, 4294901760
    %892 = vmatmul.f32.gmra.mxu0 %v891
    %v893 = vpop.f32.mrf.mxu0
    %v894 = vadd.f32 %v852, %v893
    %v895 = vand.u32 %v698, 4294901760
    %v896 = vsub.f32 %v698, %v895
    %v897 = vand.u32 %v896, 4294901760
    %898 = vmatmul.f32.gmra.mxu0 %v897
    %v899 = vpop.f32.mrf.mxu0
    %v900 = vadd.f32 %v857, %v899
    %v901 = vand.u32 %v701, 4294901760
    %v902 = vsub.f32 %v701, %v901
    %v903 = vand.u32 %v902, 4294901760
    %904 = vmatmul.f32.gmra.mxu0 %v903
    %v905 = vpop.f32.mrf.mxu0
    %v906 = vadd.f32 %v862, %v905
    %v907 = vand.u32 %v704, 4294901760
    %v908 = vsub.f32 %v704, %v907
    %v909 = vand.u32 %v908, 4294901760
    %910 = vmatmul.f32.gmra.mxu0 %v909
    %v911 = vpop.f32.mrf.mxu0
    %v912 = vadd.f32 %v867, %v911
    %913 = vdwg.mxu0
    %914 = vmatpush.xpose.msra.mxu0 0.0
    %915 = vmatpush.xpose.msra.mxu0 0.0
    %916 = vmatpush.xpose.msra.mxu0 0.0
    %917 = vmatpush.xpose.msra.mxu0 0.0
    %918 = vmatpush.xpose.msra.mxu0 0.0
    %919 = vmatpush.xpose.msra.mxu0 0.0
    %920 = vmatpush.xpose.msra.mxu0 0.0
    %921 = vmatpush.xpose.msra.mxu0 0.0
    %922 = vmatpush.xpose.msra.mxu0 0.0
    %923 = vmatpush.xpose.msra.mxu0 0.0
    %924 = vmatpush.xpose.msra.mxu0 0.0
    %925 = vmatpush.xpose.msra.mxu0 0.0
    %v926 = vand.u32 %v716, 4294901760
    %v927 = vsub.f32 %v716, %v926
    %v928 = vand.u32 %v927, 4294901760
    %929 = vmatpush.xpose.msra.mxu0 %v928
    %v930 = vand.u32 %v713, 4294901760
    %v931 = vsub.f32 %v713, %v930
    %v932 = vand.u32 %v931, 4294901760
    %933 = vmatpush.xpose.msra.mxu0 %v932
    %v934 = vand.u32 %v710, 4294901760
    %v935 = vsub.f32 %v710, %v934
    %v936 = vand.u32 %v935, 4294901760
    %937 = vmatpush.xpose.msra.mxu0 %v936
    %v938 = vand.u32 %v707, 4294901760
    %v939 = vsub.f32 %v707, %v938
    %v940 = vand.u32 %v939, 4294901760
    %941 = vmatpush.xpose.msra.mxu0 %v940
    %v942 = vand.u32 %v695, 4294901760
    %943 = vmatmul.f32.gmra.mxu0 %v942
    %v944 = vpop.f32.mrf.mxu0
    %v945 = vadd.f32 %v894, %v944
    %v946 = vand.u32 %v698, 4294901760
    %947 = vmatmul.f32.gmra.mxu0 %v946
    %v948 = vpop.f32.mrf.mxu0
    %v949 = vadd.f32 %v900, %v948
    %v950 = vand.u32 %v701, 4294901760
    %951 = vmatmul.f32.gmra.mxu0 %v950
    %v952 = vpop.f32.mrf.mxu0
    %v953 = vadd.f32 %v906, %v952
    %v954 = vand.u32 %v704, 4294901760
    %955 = vmatmul.f32.gmra.mxu0 %v954
    %v956 = vpop.f32.mrf.mxu0
    %v957 = vadd.f32 %v912, %v956
    %958 = vdwg.mxu0
    %959 = vmatpush.xpose.msra.mxu0 0.0
    %960 = vmatpush.xpose.msra.mxu0 0.0
    %961 = vmatpush.xpose.msra.mxu0 0.0
    %962 = vmatpush.xpose.msra.mxu0 0.0
    %963 = vmatpush.xpose.msra.mxu0 0.0
    %964 = vmatpush.xpose.msra.mxu0 0.0
    %965 = vmatpush.xpose.msra.mxu0 0.0
    %966 = vmatpush.xpose.msra.mxu0 0.0
    %967 = vmatpush.xpose.msra.mxu0 0.0
    %968 = vmatpush.xpose.msra.mxu0 0.0
    %969 = vmatpush.xpose.msra.mxu0 0.0
    %970 = vmatpush.xpose.msra.mxu0 0.0
    %v971 = vand.u32 %v716, 4294901760
    %972 = vmatpush.xpose.msra.mxu0 %v971
    %v973 = vand.u32 %v713, 4294901760
    %974 = vmatpush.xpose.msra.mxu0 %v973
    %v975 = vand.u32 %v710, 4294901760
    %976 = vmatpush.xpose.msra.mxu0 %v975
    %v977 = vand.u32 %v707, 4294901760
    %978 = vmatpush.xpose.msra.mxu0 %v977
    %v979 = vand.u32 %v695, 4294901760
    %980 = vmatmul.f32.gmra.mxu0 %v979
    %v981 = vpop.f32.mrf.mxu0
    %v982 = vadd.f32 %v945, %v981
    %v983 = vand.u32 %v698, 4294901760
    %984 = vmatmul.f32.gmra.mxu0 %v983
    %v985 = vpop.f32.mrf.mxu0
    %v986 = vadd.f32 %v949, %v985
    %v987 = vand.u32 %v701, 4294901760
    %988 = vmatmul.f32.gmra.mxu0 %v987
    %v989 = vpop.f32.mrf.mxu0
    %v990 = vadd.f32 %v953, %v989
    %v991 = vand.u32 %v704, 4294901760
    %992 = vmatmul.f32.gmra.mxu0 %v991
    %v993 = vpop.f32.mrf.mxu0
    %v994 = vadd.f32 %v957, %v993
    %995 = vdwg.mxu0
    %v996 = vmul.f32 %v333, %v982
    %v997 = vmul.f32 %v337, %v986
    %v998 = vmul.f32 %v341, %v990
    %v999 = vmul.f32 %v345, %v994
    %v1000 = vld [vmem:[%s3] sm:$0x1]
    %v1002 = vperm.slane %v1000, 0
    %v1004 = vmul.f32 %v996, %v1002
    %v1005 = vmul.f32 %v997, %v1002
    %v1006 = vmul.f32 %v998, %v1002
    %v1007 = vmul.f32 %v999, %v1002
    %1008 = vst.msk [vmem:[#allocation5] sm:$0xff] %vm56, %v1004
    %1009 = vst.msk [vmem:[#allocation5 + $0x8] sm:$0xff] %vm56, %v1005
    %1010 = vst.msk [vmem:[#allocation5 + $0x10] sm:$0xff] %vm56, %v1006
    %1011 = vst.msk [vmem:[#allocation5 + $0x18] sm:$0xff] %vm56, %v1007
    %1012 = vrot.lane.b32.xlu0 %v351, 96
    %v1013 = vpop.permute.xlu0 %1012
    %1014 = vrot.lane.b32.xlu0 %v352, 96
    %v1015 = vpop.permute.xlu0 %1014
    %1016 = vrot.lane.b32.xlu0 %v353, 96
    %v1017 = vpop.permute.xlu0 %1016
    %1018 = vrot.lane.b32.xlu0 %v354, 96
    %v1019 = vpop.permute.xlu0 %1018
    %v1020 = vsel %vm56, %v1013, 0
    %v1022 = vsel %vm56, %v1015, 0
    %v1024 = vsel %vm56, %v1017, 0
    %v1026 = vsel %vm56, %v1019, 0
    %1028 = vmatpush.msra.mxu0 0.0
    %1029 = vmatpush.msra.mxu0 0.0
    %1030 = vmatpush.msra.mxu0 0.0
    %1031 = vmatpush.msra.mxu0 0.0
    %1032 = vmatpush.msra.mxu0 0.0
    %1033 = vmatpush.msra.mxu0 0.0
    %1034 = vmatpush.msra.mxu0 0.0
    %1035 = vmatpush.msra.mxu0 0.0
    %1036 = vmatpush.msra.mxu0 0.0
    %1037 = vmatpush.msra.mxu0 0.0
    %1038 = vmatpush.msra.mxu0 0.0
    %1039 = vmatpush.msra.mxu0 0.0
    %v1040 = vand.u32 %v350, 4294901760
    %1041 = vmatpush.msra.mxu0 %v1040
    %v1042 = vand.u32 %v349, 4294901760
    %1043 = vmatpush.msra.mxu0 %v1042
    %v1044 = vand.u32 %v348, 4294901760
    %1045 = vmatpush.msra.mxu0 %v1044
    %v1046 = vand.u32 %v347, 4294901760
    %1047 = vmatpush.msra.mxu0 %v1046
    %v1048 = vand.u32 %v1020, 4294901760
    %v1049 = vsub.f32 %v1020, %v1048
    %v1050 = vand.u32 %v1049, 4294901760
    %v1051 = vsub.f32 %v1049, %v1050
    %v1052 = vand.u32 %v1051, 4294901760
    %1053 = vmatmul.f32.gmra.mxu0 %v1052
    %v1054 = vpop.f32.mrf.mxu0
    %v1055 = vadd.f32 0.0, %v1054
    %v1056 = vand.u32 %v1022, 4294901760
    %v1057 = vsub.f32 %v1022, %v1056
    %v1058 = vand.u32 %v1057, 4294901760
    %v1059 = vsub.f32 %v1057, %v1058
    %v1060 = vand.u32 %v1059, 4294901760
    %1061 = vmatmul.f32.gmra.mxu0 %v1060
    %v1062 = vpop.f32.mrf.mxu0
    %v1063 = vadd.f32 0.0, %v1062
    %v1064 = vand.u32 %v1024, 4294901760
    %v1065 = vsub.f32 %v1024, %v1064
    %v1066 = vand.u32 %v1065, 4294901760
    %v1067 = vsub.f32 %v1065, %v1066
    %v1068 = vand.u32 %v1067, 4294901760
    %1069 = vmatmul.f32.gmra.mxu0 %v1068
    %v1070 = vpop.f32.mrf.mxu0
    %v1071 = vadd.f32 0.0, %v1070
    %v1072 = vand.u32 %v1026, 4294901760
    %v1073 = vsub.f32 %v1026, %v1072
    %v1074 = vand.u32 %v1073, 4294901760
    %v1075 = vsub.f32 %v1073, %v1074
    %v1076 = vand.u32 %v1075, 4294901760
    %1077 = vmatmul.f32.gmra.mxu0 %v1076
    %v1078 = vpop.f32.mrf.mxu0
    %v1079 = vadd.f32 0.0, %v1078
    %1080 = vdwg.mxu0
    %1081 = vmatpush.msra.mxu0 0.0
    %1082 = vmatpush.msra.mxu0 0.0
    %1083 = vmatpush.msra.mxu0 0.0
    %1084 = vmatpush.msra.mxu0 0.0
    %1085 = vmatpush.msra.mxu0 0.0
    %1086 = vmatpush.msra.mxu0 0.0
    %1087 = vmatpush.msra.mxu0 0.0
    %1088 = vmatpush.msra.mxu0 0.0
    %1089 = vmatpush.msra.mxu0 0.0
    %1090 = vmatpush.msra.mxu0 0.0
    %1091 = vmatpush.msra.mxu0 0.0
    %1092 = vmatpush.msra.mxu0 0.0
    %v1093 = vand.u32 %v350, 4294901760
    %v1094 = vsub.f32 %v350, %v1093
    %v1095 = vand.u32 %v1094, 4294901760
    %v1096 = vsub.f32 %v1094, %v1095
    %v1097 = vand.u32 %v1096, 4294901760
    %1098 = vmatpush.msra.mxu0 %v1097
    %v1099 = vand.u32 %v349, 4294901760
    %v1100 = vsub.f32 %v349, %v1099
    %v1101 = vand.u32 %v1100, 4294901760
    %v1102 = vsub.f32 %v1100, %v1101
    %v1103 = vand.u32 %v1102, 4294901760
    %1104 = vmatpush.msra.mxu0 %v1103
    %v1105 = vand.u32 %v348, 4294901760
    %v1106 = vsub.f32 %v348, %v1105
    %v1107 = vand.u32 %v1106, 4294901760
    %v1108 = vsub.f32 %v1106, %v1107
    %v1109 = vand.u32 %v1108, 4294901760
    %1110 = vmatpush.msra.mxu0 %v1109
    %v1111 = vand.u32 %v347, 4294901760
    %v1112 = vsub.f32 %v347, %v1111
    %v1113 = vand.u32 %v1112, 4294901760
    %v1114 = vsub.f32 %v1112, %v1113
    %v1115 = vand.u32 %v1114, 4294901760
    %1116 = vmatpush.msra.mxu0 %v1115
    %v1117 = vand.u32 %v1020, 4294901760
    %1118 = vmatmul.f32.gmra.mxu0 %v1117
    %v1119 = vpop.f32.mrf.mxu0
    %v1120 = vadd.f32 %v1055, %v1119
    %v1121 = vand.u32 %v1022, 4294901760
    %1122 = vmatmul.f32.gmra.mxu0 %v1121
    %v1123 = vpop.f32.mrf.mxu0
    %v1124 = vadd.f32 %v1063, %v1123
    %v1125 = vand.u32 %v1024, 4294901760
    %1126 = vmatmul.f32.gmra.mxu0 %v1125
    %v1127 = vpop.f32.mrf.mxu0
    %v1128 = vadd.f32 %v1071, %v1127
    %v1129 = vand.u32 %v1026, 4294901760
    %1130 = vmatmul.f32.gmra.mxu0 %v1129
    %v1131 = vpop.f32.mrf.mxu0
    %v1132 = vadd.f32 %v1079, %v1131
    %1133 = vdwg.mxu0
    %1134 = vmatpush.msra.mxu0 0.0
    %1135 = vmatpush.msra.mxu0 0.0
    %1136 = vmatpush.msra.mxu0 0.0
    %1137 = vmatpush.msra.mxu0 0.0
    %1138 = vmatpush.msra.mxu0 0.0
    %1139 = vmatpush.msra.mxu0 0.0
    %1140 = vmatpush.msra.mxu0 0.0
    %1141 = vmatpush.msra.mxu0 0.0
    %1142 = vmatpush.msra.mxu0 0.0
    %1143 = vmatpush.msra.mxu0 0.0
    %1144 = vmatpush.msra.mxu0 0.0
    %1145 = vmatpush.msra.mxu0 0.0
    %v1146 = vand.u32 %v350, 4294901760
    %v1147 = vsub.f32 %v350, %v1146
    %1148 = vmatpush.msra.mxu0 %v1147
    %v1149 = vand.u32 %v349, 4294901760
    %v1150 = vsub.f32 %v349, %v1149
    %1151 = vmatpush.msra.mxu0 %v1150
    %v1152 = vand.u32 %v348, 4294901760
    %v1153 = vsub.f32 %v348, %v1152
    %1154 = vmatpush.msra.mxu0 %v1153
    %v1155 = vand.u32 %v347, 4294901760
    %v1156 = vsub.f32 %v347, %v1155
    %1157 = vmatpush.msra.mxu0 %v1156
    %v1158 = vand.u32 %v1020, 4294901760
    %v1159 = vsub.f32 %v1020, %v1158
    %1160 = vmatmul.f32.gmra.mxu0 %v1159
    %v1161 = vpop.f32.mrf.mxu0
    %v1162 = vadd.f32 %v1120, %v1161
    %v1163 = vand.u32 %v1022, 4294901760
    %v1164 = vsub.f32 %v1022, %v1163
    %1165 = vmatmul.f32.gmra.mxu0 %v1164
    %v1166 = vpop.f32.mrf.mxu0
    %v1167 = vadd.f32 %v1124, %v1166
    %v1168 = vand.u32 %v1024, 4294901760
    %v1169 = vsub.f32 %v1024, %v1168
    %1170 = vmatmul.f32.gmra.mxu0 %v1169
    %v1171 = vpop.f32.mrf.mxu0
    %v1172 = vadd.f32 %v1128, %v1171
    %v1173 = vand.u32 %v1026, 4294901760
    %v1174 = vsub.f32 %v1026, %v1173
    %1175 = vmatmul.f32.gmra.mxu0 %v1174
    %v1176 = vpop.f32.mrf.mxu0
    %v1177 = vadd.f32 %v1132, %v1176
    %1178 = vdwg.mxu0
    %1179 = vmatpush.msra.mxu0 0.0
    %1180 = vmatpush.msra.mxu0 0.0
    %1181 = vmatpush.msra.mxu0 0.0
    %1182 = vmatpush.msra.mxu0 0.0
    %1183 = vmatpush.msra.mxu0 0.0
    %1184 = vmatpush.msra.mxu0 0.0
    %1185 = vmatpush.msra.mxu0 0.0
    %1186 = vmatpush.msra.mxu0 0.0
    %1187 = vmatpush.msra.mxu0 0.0
    %1188 = vmatpush.msra.mxu0 0.0
    %1189 = vmatpush.msra.mxu0 0.0
    %1190 = vmatpush.msra.mxu0 0.0
    %v1191 = vand.u32 %v350, 4294901760
    %1192 = vmatpush.msra.mxu0 %v1191
    %v1193 = vand.u32 %v349, 4294901760
    %1194 = vmatpush.msra.mxu0 %v1193
    %v1195 = vand.u32 %v348, 4294901760
    %1196 = vmatpush.msra.mxu0 %v1195
    %v1197 = vand.u32 %v347, 4294901760
    %1198 = vmatpush.msra.mxu0 %v1197
    %v1199 = vand.u32 %v1020, 4294901760
    %v1200 = vsub.f32 %v1020, %v1199
    %v1201 = vand.u32 %v1200, 4294901760
    %1202 = vmatmul.f32.gmra.mxu0 %v1201
    %v1203 = vpop.f32.mrf.mxu0
    %v1204 = vadd.f32 %v1162, %v1203
    %v1205 = vand.u32 %v1022, 4294901760
    %v1206 = vsub.f32 %v1022, %v1205
    %v1207 = vand.u32 %v1206, 4294901760
    %1208 = vmatmul.f32.gmra.mxu0 %v1207
    %v1209 = vpop.f32.mrf.mxu0
    %v1210 = vadd.f32 %v1167, %v1209
    %v1211 = vand.u32 %v1024, 4294901760
    %v1212 = vsub.f32 %v1024, %v1211
    %v1213 = vand.u32 %v1212, 4294901760
    %1214 = vmatmul.f32.gmra.mxu0 %v1213
    %v1215 = vpop.f32.mrf.mxu0
    %v1216 = vadd.f32 %v1172, %v1215
    %v1217 = vand.u32 %v1026, 4294901760
    %v1218 = vsub.f32 %v1026, %v1217
    %v1219 = vand.u32 %v1218, 4294901760
    %1220 = vmatmul.f32.gmra.mxu0 %v1219
    %v1221 = vpop.f32.mrf.mxu0
    %v1222 = vadd.f32 %v1177, %v1221
    %1223 = vdwg.mxu0
    %1224 = vmatpush.msra.mxu0 0.0
    %1225 = vmatpush.msra.mxu0 0.0
    %1226 = vmatpush.msra.mxu0 0.0
    %1227 = vmatpush.msra.mxu0 0.0
    %1228 = vmatpush.msra.mxu0 0.0
    %1229 = vmatpush.msra.mxu0 0.0
    %1230 = vmatpush.msra.mxu0 0.0
    %1231 = vmatpush.msra.mxu0 0.0
    %1232 = vmatpush.msra.mxu0 0.0
    %1233 = vmatpush.msra.mxu0 0.0
    %1234 = vmatpush.msra.mxu0 0.0
    %1235 = vmatpush.msra.mxu0 0.0
    %v1236 = vand.u32 %v350, 4294901760
    %v1237 = vsub.f32 %v350, %v1236
    %v1238 = vand.u32 %v1237, 4294901760
    %1239 = vmatpush.msra.mxu0 %v1238
    %v1240 = vand.u32 %v349, 4294901760
    %v1241 = vsub.f32 %v349, %v1240
    %v1242 = vand.u32 %v1241, 4294901760
    %1243 = vmatpush.msra.mxu0 %v1242
    %v1244 = vand.u32 %v348, 4294901760
    %v1245 = vsub.f32 %v348, %v1244
    %v1246 = vand.u32 %v1245, 4294901760
    %1247 = vmatpush.msra.mxu0 %v1246
    %v1248 = vand.u32 %v347, 4294901760
    %v1249 = vsub.f32 %v347, %v1248
    %v1250 = vand.u32 %v1249, 4294901760
    %1251 = vmatpush.msra.mxu0 %v1250
    %v1252 = vand.u32 %v1020, 4294901760
    %1253 = vmatmul.f32.gmra.mxu0 %v1252
    %v1254 = vpop.f32.mrf.mxu0
    %v1255 = vadd.f32 %v1204, %v1254
    %v1256 = vand.u32 %v1022, 4294901760
    %1257 = vmatmul.f32.gmra.mxu0 %v1256
    %v1258 = vpop.f32.mrf.mxu0
    %v1259 = vadd.f32 %v1210, %v1258
    %v1260 = vand.u32 %v1024, 4294901760
    %1261 = vmatmul.f32.gmra.mxu0 %v1260
    %v1262 = vpop.f32.mrf.mxu0
    %v1263 = vadd.f32 %v1216, %v1262
    %v1264 = vand.u32 %v1026, 4294901760
    %1265 = vmatmul.f32.gmra.mxu0 %v1264
    %v1266 = vpop.f32.mrf.mxu0
    %v1267 = vadd.f32 %v1222, %v1266
    %1268 = vdwg.mxu0
    %1269 = vmatpush.msra.mxu0 0.0
    %1270 = vmatpush.msra.mxu0 0.0
    %1271 = vmatpush.msra.mxu0 0.0
    %1272 = vmatpush.msra.mxu0 0.0
    %1273 = vmatpush.msra.mxu0 0.0
    %1274 = vmatpush.msra.mxu0 0.0
    %1275 = vmatpush.msra.mxu0 0.0
    %1276 = vmatpush.msra.mxu0 0.0
    %1277 = vmatpush.msra.mxu0 0.0
    %1278 = vmatpush.msra.mxu0 0.0
    %1279 = vmatpush.msra.mxu0 0.0
    %1280 = vmatpush.msra.mxu0 0.0
    %v1281 = vand.u32 %v350, 4294901760
    %1282 = vmatpush.msra.mxu0 %v1281
    %v1283 = vand.u32 %v349, 4294901760
    %1284 = vmatpush.msra.mxu0 %v1283
    %v1285 = vand.u32 %v348, 4294901760
    %1286 = vmatpush.msra.mxu0 %v1285
    %v1287 = vand.u32 %v347, 4294901760
    %1288 = vmatpush.msra.mxu0 %v1287
    %v1289 = vand.u32 %v1020, 4294901760
    %1290 = vmatmul.f32.gmra.mxu0 %v1289
    %v1291 = vpop.f32.mrf.mxu0
    %v1292 = vadd.f32 %v1255, %v1291
    %v1293 = vand.u32 %v1022, 4294901760
    %1294 = vmatmul.f32.gmra.mxu0 %v1293
    %v1295 = vpop.f32.mrf.mxu0
    %v1296 = vadd.f32 %v1259, %v1295
    %v1297 = vand.u32 %v1024, 4294901760
    %1298 = vmatmul.f32.gmra.mxu0 %v1297
    %v1299 = vpop.f32.mrf.mxu0
    %v1300 = vadd.f32 %v1263, %v1299
    %v1301 = vand.u32 %v1026, 4294901760
    %1302 = vmatmul.f32.gmra.mxu0 %v1301
    %v1303 = vpop.f32.mrf.mxu0
    %v1304 = vadd.f32 %v1267, %v1303
    %1305 = vdwg.mxu0
    %v1306 = vmul.f32 %v1292, 0.0625
    %v1307 = vmul.f32 %v1296, 0.0625
    %v1308 = vmul.f32 %v1300, 0.0625
    %v1309 = vmul.f32 %v1304, 0.0625
    %v1310 = vadd.f32 %v1306, 1e-06
    %v1311 = vadd.f32 %v1307, 1e-06
    %v1312 = vadd.f32 %v1308, 1e-06
    %v1313 = vadd.f32 %v1309, 1e-06
    %v1314 = vrsqrt.pop %v1310
    %v1315 = vmul.f32 %v1314, %v1310
    %v1316 = vmul.f32 %v1315, %v1314
    %v1317 = vmul.f32 0.5, %v1316
    %v1318 = vsub.f32 1.5, %v1317
    %v1319 = vmul.f32 %v1314, %v1318
    %vm1320 = vweird.f32 %v1310
    %vm1321 = vweird.f32 %v1314
    %vm1322 = vmor %vm1320, %vm1321
    %v1323 = vsel %vm1322, %v1314, %v1319
    %v1324 = vrsqrt.pop %v1311
    %v1325 = vmul.f32 %v1324, %v1311
    %v1326 = vmul.f32 %v1325, %v1324
    %v1327 = vmul.f32 0.5, %v1326
    %v1328 = vsub.f32 1.5, %v1327
    %v1329 = vmul.f32 %v1324, %v1328
    %vm1330 = vweird.f32 %v1311
    %vm1331 = vweird.f32 %v1324
    %vm1332 = vmor %vm1330, %vm1331
    %v1333 = vsel %vm1332, %v1324, %v1329
    %v1334 = vrsqrt.pop %v1312
    %v1335 = vmul.f32 %v1334, %v1312
    %v1336 = vmul.f32 %v1335, %v1334
    %v1337 = vmul.f32 0.5, %v1336
    %v1338 = vsub.f32 1.5, %v1337
    %v1339 = vmul.f32 %v1334, %v1338
    %vm1340 = vweird.f32 %v1312
    %vm1341 = vweird.f32 %v1334
    %vm1342 = vmor %vm1340, %vm1341
    %v1343 = vsel %vm1342, %v1334, %v1339
    %v1344 = vrsqrt.pop %v1313
    %v1345 = vmul.f32 %v1344, %v1313
    %v1346 = vmul.f32 %v1345, %v1344
    %v1347 = vmul.f32 0.5, %v1346
    %v1348 = vsub.f32 1.5, %v1347
    %v1349 = vmul.f32 %v1344, %v1348
    %vm1350 = vweird.f32 %v1313
    %vm1351 = vweird.f32 %v1344
    %vm1352 = vmor %vm1350, %vm1351
    %v1353 = vsel %vm1352, %v1344, %v1349
    %v1355 = vsel %vm693, %v1323, 0
    %v1358 = vsel %vm693, %v1333, 0
    %v1361 = vsel %vm693, %v1343, 0
    %v1364 = vsel %vm693, %v1353, 0
    %1366 = vmatpush.xpose.msra.mxu0 0.0
    %1367 = vmatpush.xpose.msra.mxu0 0.0
    %1368 = vmatpush.xpose.msra.mxu0 0.0
    %1369 = vmatpush.xpose.msra.mxu0 0.0
    %1370 = vmatpush.xpose.msra.mxu0 0.0
    %1371 = vmatpush.xpose.msra.mxu0 0.0
    %1372 = vmatpush.xpose.msra.mxu0 0.0
    %1373 = vmatpush.xpose.msra.mxu0 0.0
    %1374 = vmatpush.xpose.msra.mxu0 0.0
    %1375 = vmatpush.xpose.msra.mxu0 0.0
    %1376 = vmatpush.xpose.msra.mxu0 0.0
    %1377 = vmatpush.xpose.msra.mxu0 0.0
    %v1378 = vand.u32 %v716, 4294901760
    %1379 = vmatpush.xpose.msra.mxu0 %v1378
    %v1380 = vand.u32 %v713, 4294901760
    %1381 = vmatpush.xpose.msra.mxu0 %v1380
    %v1382 = vand.u32 %v710, 4294901760
    %1383 = vmatpush.xpose.msra.mxu0 %v1382
    %v1384 = vand.u32 %v707, 4294901760
    %1385 = vmatpush.xpose.msra.mxu0 %v1384
    %v1386 = vand.u32 %v1355, 4294901760
    %v1387 = vsub.f32 %v1355, %v1386
    %v1388 = vand.u32 %v1387, 4294901760
    %v1389 = vsub.f32 %v1387, %v1388
    %v1390 = vand.u32 %v1389, 4294901760
    %1391 = vmatmul.f32.gmra.mxu0 %v1390
    %v1392 = vpop.f32.mrf.mxu0
    %v1393 = vadd.f32 0.0, %v1392
    %v1394 = vand.u32 %v1358, 4294901760
    %v1395 = vsub.f32 %v1358, %v1394
    %v1396 = vand.u32 %v1395, 4294901760
    %v1397 = vsub.f32 %v1395, %v1396
    %v1398 = vand.u32 %v1397, 4294901760
    %1399 = vmatmul.f32.gmra.mxu0 %v1398
    %v1400 = vpop.f32.mrf.mxu0
    %v1401 = vadd.f32 0.0, %v1400
    %v1402 = vand.u32 %v1361, 4294901760
    %v1403 = vsub.f32 %v1361, %v1402
    %v1404 = vand.u32 %v1403, 4294901760
    %v1405 = vsub.f32 %v1403, %v1404
    %v1406 = vand.u32 %v1405, 4294901760
    %1407 = vmatmul.f32.gmra.mxu0 %v1406
    %v1408 = vpop.f32.mrf.mxu0
    %v1409 = vadd.f32 0.0, %v1408
    %v1410 = vand.u32 %v1364, 4294901760
    %v1411 = vsub.f32 %v1364, %v1410
    %v1412 = vand.u32 %v1411, 4294901760
    %v1413 = vsub.f32 %v1411, %v1412
    %v1414 = vand.u32 %v1413, 4294901760
    %1415 = vmatmul.f32.gmra.mxu0 %v1414
    %v1416 = vpop.f32.mrf.mxu0
    %v1417 = vadd.f32 0.0, %v1416
    %1418 = vdwg.mxu0
    %1419 = vmatpush.xpose.msra.mxu0 0.0
    %1420 = vmatpush.xpose.msra.mxu0 0.0
    %1421 = vmatpush.xpose.msra.mxu0 0.0
    %1422 = vmatpush.xpose.msra.mxu0 0.0
    %1423 = vmatpush.xpose.msra.mxu0 0.0
    %1424 = vmatpush.xpose.msra.mxu0 0.0
    %1425 = vmatpush.xpose.msra.mxu0 0.0
    %1426 = vmatpush.xpose.msra.mxu0 0.0
    %1427 = vmatpush.xpose.msra.mxu0 0.0
    %1428 = vmatpush.xpose.msra.mxu0 0.0
    %1429 = vmatpush.xpose.msra.mxu0 0.0
    %1430 = vmatpush.xpose.msra.mxu0 0.0
    %v1431 = vand.u32 %v716, 4294901760
    %v1432 = vsub.f32 %v716, %v1431
    %v1433 = vand.u32 %v1432, 4294901760
    %v1434 = vsub.f32 %v1432, %v1433
    %v1435 = vand.u32 %v1434, 4294901760
    %1436 = vmatpush.xpose.msra.mxu0 %v1435
    %v1437 = vand.u32 %v713, 4294901760
    %v1438 = vsub.f32 %v713, %v1437
    %v1439 = vand.u32 %v1438, 4294901760
    %v1440 = vsub.f32 %v1438, %v1439
    %v1441 = vand.u32 %v1440, 4294901760
    %1442 = vmatpush.xpose.msra.mxu0 %v1441
    %v1443 = vand.u32 %v710, 4294901760
    %v1444 = vsub.f32 %v710, %v1443
    %v1445 = vand.u32 %v1444, 4294901760
    %v1446 = vsub.f32 %v1444, %v1445
    %v1447 = vand.u32 %v1446, 4294901760
    %1448 = vmatpush.xpose.msra.mxu0 %v1447
    %v1449 = vand.u32 %v707, 4294901760
    %v1450 = vsub.f32 %v707, %v1449
    %v1451 = vand.u32 %v1450, 4294901760
    %v1452 = vsub.f32 %v1450, %v1451
    %v1453 = vand.u32 %v1452, 4294901760
    %1454 = vmatpush.xpose.msra.mxu0 %v1453
    %v1455 = vand.u32 %v1355, 4294901760
    %1456 = vmatmul.f32.gmra.mxu0 %v1455
    %v1457 = vpop.f32.mrf.mxu0
    %v1458 = vadd.f32 %v1393, %v1457
    %v1459 = vand.u32 %v1358, 4294901760
    %1460 = vmatmul.f32.gmra.mxu0 %v1459
    %v1461 = vpop.f32.mrf.mxu0
    %v1462 = vadd.f32 %v1401, %v1461
    %v1463 = vand.u32 %v1361, 4294901760
    %1464 = vmatmul.f32.gmra.mxu0 %v1463
    %v1465 = vpop.f32.mrf.mxu0
    %v1466 = vadd.f32 %v1409, %v1465
    %v1467 = vand.u32 %v1364, 4294901760
    %1468 = vmatmul.f32.gmra.mxu0 %v1467
    %v1469 = vpop.f32.mrf.mxu0
    %v1470 = vadd.f32 %v1417, %v1469
    %1471 = vdwg.mxu0
    %1472 = vmatpush.xpose.msra.mxu0 0.0
    %1473 = vmatpush.xpose.msra.mxu0 0.0
    %1474 = vmatpush.xpose.msra.mxu0 0.0
    %1475 = vmatpush.xpose.msra.mxu0 0.0
    %1476 = vmatpush.xpose.msra.mxu0 0.0
    %1477 = vmatpush.xpose.msra.mxu0 0.0
    %1478 = vmatpush.xpose.msra.mxu0 0.0
    %1479 = vmatpush.xpose.msra.mxu0 0.0
    %1480 = vmatpush.xpose.msra.mxu0 0.0
    %1481 = vmatpush.xpose.msra.mxu0 0.0
    %1482 = vmatpush.xpose.msra.mxu0 0.0
    %1483 = vmatpush.xpose.msra.mxu0 0.0
    %v1484 = vand.u32 %v716, 4294901760
    %v1485 = vsub.f32 %v716, %v1484
    %1486 = vmatpush.xpose.msra.mxu0 %v1485
    %v1487 = vand.u32 %v713, 4294901760
    %v1488 = vsub.f32 %v713, %v1487
    %1489 = vmatpush.xpose.msra.mxu0 %v1488
    %v1490 = vand.u32 %v710, 4294901760
    %v1491 = vsub.f32 %v710, %v1490
    %1492 = vmatpush.xpose.msra.mxu0 %v1491
    %v1493 = vand.u32 %v707, 4294901760
    %v1494 = vsub.f32 %v707, %v1493
    %1495 = vmatpush.xpose.msra.mxu0 %v1494
    %v1496 = vand.u32 %v1355, 4294901760
    %v1497 = vsub.f32 %v1355, %v1496
    %1498 = vmatmul.f32.gmra.mxu0 %v1497
    %v1499 = vpop.f32.mrf.mxu0
    %v1500 = vadd.f32 %v1458, %v1499
    %v1501 = vand.u32 %v1358, 4294901760
    %v1502 = vsub.f32 %v1358, %v1501
    %1503 = vmatmul.f32.gmra.mxu0 %v1502
    %v1504 = vpop.f32.mrf.mxu0
    %v1505 = vadd.f32 %v1462, %v1504
    %v1506 = vand.u32 %v1361, 4294901760
    %v1507 = vsub.f32 %v1361, %v1506
    %1508 = vmatmul.f32.gmra.mxu0 %v1507
    %v1509 = vpop.f32.mrf.mxu0
    %v1510 = vadd.f32 %v1466, %v1509
    %v1511 = vand.u32 %v1364, 4294901760
    %v1512 = vsub.f32 %v1364, %v1511
    %1513 = vmatmul.f32.gmra.mxu0 %v1512
    %v1514 = vpop.f32.mrf.mxu0
    %v1515 = vadd.f32 %v1470, %v1514
    %1516 = vdwg.mxu0
    %1517 = vmatpush.xpose.msra.mxu0 0.0
    %1518 = vmatpush.xpose.msra.mxu0 0.0
    %1519 = vmatpush.xpose.msra.mxu0 0.0
    %1520 = vmatpush.xpose.msra.mxu0 0.0
    %1521 = vmatpush.xpose.msra.mxu0 0.0
    %1522 = vmatpush.xpose.msra.mxu0 0.0
    %1523 = vmatpush.xpose.msra.mxu0 0.0
    %1524 = vmatpush.xpose.msra.mxu0 0.0
    %1525 = vmatpush.xpose.msra.mxu0 0.0
    %1526 = vmatpush.xpose.msra.mxu0 0.0
    %1527 = vmatpush.xpose.msra.mxu0 0.0
    %1528 = vmatpush.xpose.msra.mxu0 0.0
    %v1529 = vand.u32 %v716, 4294901760
    %1530 = vmatpush.xpose.msra.mxu0 %v1529
    %v1531 = vand.u32 %v713, 4294901760
    %1532 = vmatpush.xpose.msra.mxu0 %v1531
    %v1533 = vand.u32 %v710, 4294901760
    %1534 = vmatpush.xpose.msra.mxu0 %v1533
    %v1535 = vand.u32 %v707, 4294901760
    %1536 = vmatpush.xpose.msra.mxu0 %v1535
    %v1537 = vand.u32 %v1355, 4294901760
    %v1538 = vsub.f32 %v1355, %v1537
    %v1539 = vand.u32 %v1538, 4294901760
    %1540 = vmatmul.f32.gmra.mxu0 %v1539
    %v1541 = vpop.f32.mrf.mxu0
    %v1542 = vadd.f32 %v1500, %v1541
    %v1543 = vand.u32 %v1358, 4294901760
    %v1544 = vsub.f32 %v1358, %v1543
    %v1545 = vand.u32 %v1544, 4294901760
    %1546 = vmatmul.f32.gmra.mxu0 %v1545
    %v1547 = vpop.f32.mrf.mxu0
    %v1548 = vadd.f32 %v1505, %v1547
    %v1549 = vand.u32 %v1361, 4294901760
    %v1550 = vsub.f32 %v1361, %v1549
    %v1551 = vand.u32 %v1550, 4294901760
    %1552 = vmatmul.f32.gmra.mxu0 %v1551
    %v1553 = vpop.f32.mrf.mxu0
    %v1554 = vadd.f32 %v1510, %v1553
    %v1555 = vand.u32 %v1364, 4294901760
    %v1556 = vsub.f32 %v1364, %v1555
    %v1557 = vand.u32 %v1556, 4294901760
    %1558 = vmatmul.f32.gmra.mxu0 %v1557
    %v1559 = vpop.f32.mrf.mxu0
    %v1560 = vadd.f32 %v1515, %v1559
    %1561 = vdwg.mxu0
    %1562 = vmatpush.xpose.msra.mxu0 0.0
    %1563 = vmatpush.xpose.msra.mxu0 0.0
    %1564 = vmatpush.xpose.msra.mxu0 0.0
    %1565 = vmatpush.xpose.msra.mxu0 0.0
    %1566 = vmatpush.xpose.msra.mxu0 0.0
    %1567 = vmatpush.xpose.msra.mxu0 0.0
    %1568 = vmatpush.xpose.msra.mxu0 0.0
    %1569 = vmatpush.xpose.msra.mxu0 0.0
    %1570 = vmatpush.xpose.msra.mxu0 0.0
    %1571 = vmatpush.xpose.msra.mxu0 0.0
    %1572 = vmatpush.xpose.msra.mxu0 0.0
    %1573 = vmatpush.xpose.msra.mxu0 0.0
    %v1574 = vand.u32 %v716, 4294901760
    %v1575 = vsub.f32 %v716, %v1574
    %v1576 = vand.u32 %v1575, 4294901760
    %1577 = vmatpush.xpose.msra.mxu0 %v1576
    %v1578 = vand.u32 %v713, 4294901760
    %v1579 = vsub.f32 %v713, %v1578
    %v1580 = vand.u32 %v1579, 4294901760
    %1581 = vmatpush.xpose.msra.mxu0 %v1580
    %v1582 = vand.u32 %v710, 4294901760
    %v1583 = vsub.f32 %v710, %v1582
    %v1584 = vand.u32 %v1583, 4294901760
    %1585 = vmatpush.xpose.msra.mxu0 %v1584
    %v1586 = vand.u32 %v707, 4294901760
    %v1587 = vsub.f32 %v707, %v1586
    %v1588 = vand.u32 %v1587, 4294901760
    %1589 = vmatpush.xpose.msra.mxu0 %v1588
    %v1590 = vand.u32 %v1355, 4294901760
    %1591 = vmatmul.f32.gmra.mxu0 %v1590
    %v1592 = vpop.f32.mrf.mxu0
    %v1593 = vadd.f32 %v1542, %v1592
    %v1594 = vand.u32 %v1358, 4294901760
    %1595 = vmatmul.f32.gmra.mxu0 %v1594
    %v1596 = vpop.f32.mrf.mxu0
    %v1597 = vadd.f32 %v1548, %v1596
    %v1598 = vand.u32 %v1361, 4294901760
    %1599 = vmatmul.f32.gmra.mxu0 %v1598
    %v1600 = vpop.f32.mrf.mxu0
    %v1601 = vadd.f32 %v1554, %v1600
    %v1602 = vand.u32 %v1364, 4294901760
    %1603 = vmatmul.f32.gmra.mxu0 %v1602
    %v1604 = vpop.f32.mrf.mxu0
    %v1605 = vadd.f32 %v1560, %v1604
    %1606 = vdwg.mxu0
    %1607 = vmatpush.xpose.msra.mxu0 0.0
    %1608 = vmatpush.xpose.msra.mxu0 0.0
    %1609 = vmatpush.xpose.msra.mxu0 0.0
    %1610 = vmatpush.xpose.msra.mxu0 0.0
    %1611 = vmatpush.xpose.msra.mxu0 0.0
    %1612 = vmatpush.xpose.msra.mxu0 0.0
    %1613 = vmatpush.xpose.msra.mxu0 0.0
    %1614 = vmatpush.xpose.msra.mxu0 0.0
    %1615 = vmatpush.xpose.msra.mxu0 0.0
    %1616 = vmatpush.xpose.msra.mxu0 0.0
    %1617 = vmatpush.xpose.msra.mxu0 0.0
    %1618 = vmatpush.xpose.msra.mxu0 0.0
    %v1619 = vand.u32 %v716, 4294901760
    %1620 = vmatpush.xpose.msra.mxu0 %v1619
    %v1621 = vand.u32 %v713, 4294901760
    %1622 = vmatpush.xpose.msra.mxu0 %v1621
    %v1623 = vand.u32 %v710, 4294901760
    %1624 = vmatpush.xpose.msra.mxu0 %v1623
    %v1625 = vand.u32 %v707, 4294901760
    %1626 = vmatpush.xpose.msra.mxu0 %v1625
    %v1627 = vand.u32 %v1355, 4294901760
    %1628 = vmatmul.f32.gmra.mxu0 %v1627
    %v1629 = vpop.f32.mrf.mxu0
    %v1630 = vadd.f32 %v1593, %v1629
    %v1631 = vand.u32 %v1358, 4294901760
    %1632 = vmatmul.f32.gmra.mxu0 %v1631
    %v1633 = vpop.f32.mrf.mxu0
    %v1634 = vadd.f32 %v1597, %v1633
    %v1635 = vand.u32 %v1361, 4294901760
    %1636 = vmatmul.f32.gmra.mxu0 %v1635
    %v1637 = vpop.f32.mrf.mxu0
    %v1638 = vadd.f32 %v1601, %v1637
    %v1639 = vand.u32 %v1364, 4294901760
    %1640 = vmatmul.f32.gmra.mxu0 %v1639
    %v1641 = vpop.f32.mrf.mxu0
    %v1642 = vadd.f32 %v1605, %v1641
    %1643 = vdwg.mxu0
    %1648 = vrot.lane.b32.xlu0 %v1630, 32
    %v1649 = vpop.permute.xlu0 %1648
    %1650 = vrot.lane.b32.xlu0 %v1634, 32
    %v1651 = vpop.permute.xlu0 %1650
    %1652 = vrot.lane.b32.xlu0 %v1638, 32
    %v1653 = vpop.permute.xlu0 %1652
    %1654 = vrot.lane.b32.xlu0 %v1642, 32
    %v1655 = vpop.permute.xlu0 %1654
    %v1660 = vmul.f32 %v333, %v1649
    %v1661 = vmul.f32 %v337, %v1651
    %v1662 = vmul.f32 %v341, %v1653
    %v1663 = vmul.f32 %v345, %v1655
    %v1664 = vld [vmem:[%s4] sm:$0x1]
    %v1666 = vperm.slane %v1664, 0
    %1667 = vrot.lane.b32.xlu0 %v1666, 32
    %v1668 = vpop.permute.xlu0 %1667
    %v1670 = vmul.f32 %v1660, %v1668
    %v1671 = vmul.f32 %v1661, %v1668
    %v1672 = vmul.f32 %v1662, %v1668
    %v1673 = vmul.f32 %v1663, %v1668
    %1678 = vrot.lane.b32.xlu0 %v1670, 96
    %v1679 = vpop.permute.xlu0 %1678
    %1680 = vrot.lane.b32.xlu0 %v1671, 96
    %v1681 = vpop.permute.xlu0 %1680
    %1682 = vrot.lane.b32.xlu0 %v1672, 96
    %v1683 = vpop.permute.xlu0 %1682
    %1684 = vrot.lane.b32.xlu0 %v1673, 96
    %v1685 = vpop.permute.xlu0 %1684
    %1690 = vst.msk [vmem:[#allocation6] sm:$0xff] %vm56, %v1679
    %1691 = vst.msk [vmem:[#allocation6 + $0x8] sm:$0xff] %vm56, %v1681
    %1692 = vst.msk [vmem:[#allocation6 + $0x10] sm:$0xff] %vm56, %v1683
    %1693 = vst.msk [vmem:[#allocation6 + $0x18] sm:$0xff] %vm56, %v1685
    %1698 = vrot.lane.b32.xlu0 %v333, 64
    %v1699 = vpop.permute.xlu0 %1698
    %1700 = vrot.lane.b32.xlu0 %v337, 64
    %v1701 = vpop.permute.xlu0 %1700
    %1702 = vrot.lane.b32.xlu0 %v341, 64
    %v1703 = vpop.permute.xlu0 %1702
    %1704 = vrot.lane.b32.xlu0 %v345, 64
    %v1705 = vpop.permute.xlu0 %1704
    %1710 = vst.msk [vmem:[#allocation8] sm:$0xff] %vm56, %v1699
    %1711 = vst.msk [vmem:[#allocation8 + $0x8] sm:$0xff] %vm56, %v1701
    %1712 = vst.msk [vmem:[#allocation8 + $0x10] sm:$0xff] %vm56, %v1703
    %1713 = vst.msk [vmem:[#allocation8 + $0x18] sm:$0xff] %vm56, %v1705
    // Predicated region
    $region30: #{tpu_custom_call.1} parent=1 // pred_check
      _
    $region31: #{tpu_custom_call.1} parent=1 // pred_check_branch
      %1715 = sbr.rel (0) target = $region33
    $region32: #{tpu_custom_call.1} parent=1 // pred_region
      %1717 = vsyncadd [#allocation4], 0
      %s1718 = sshll.u32 [#allocation5], 4
      %s1719 = int_to_ptr.vmem [resolvable:$true] %s1718
      %s1720 = sshll.u32 %s6, 4
      %s1721 = int_to_ptr.hbm [resolvable:$true] %s1720
      %1726 = dma.vmem_to_hbm [thread:$0]  %s1719, 512, %s1721, [#allocation4], 128, 128, 8
    $region33: #{tpu_custom_call.1} parent=1 // pred_fallthru
      _
    // Predicated region
    $region34: #{tpu_custom_call.1} parent=1 // pred_check
      _
    $region35: #{tpu_custom_call.1} parent=1 // pred_check_branch
      %1728 = sbr.rel (0) target = $region37
    $region36: #{tpu_custom_call.1} parent=1 // pred_region
      %1730 = vsyncadd [#allocation7], 0
      %s1731 = sshll.u32 [#allocation6], 4
      %s1732 = int_to_ptr.vmem [resolvable:$true] %s1731
      %s1733 = sshll.u32 %s7, 4
      %s1734 = int_to_ptr.hbm [resolvable:$true] %s1733
      %1739 = dma.vmem_to_hbm [thread:$0]  %s1732, 512, %s1734, [#allocation7], 128, 128, 8
    $region37: #{tpu_custom_call.1} parent=1 // pred_fallthru
      _
    // Predicated region
    $region38: #{tpu_custom_call.1} parent=1 // pred_check
      _
    $region39: #{tpu_custom_call.1} parent=1 // pred_check_branch
      %1741 = sbr.rel (0) target = $region41
    $region40: #{tpu_custom_call.1} parent=1 // pred_region
      %1743 = vsyncadd [#allocation7], 0
      %s1744 = sshll.u32 [#allocation8], 4
      %s1745 = int_to_ptr.vmem [resolvable:$true] %s1744
      %s1746 = sshll.u32 %s8, 4
      %s1747 = int_to_ptr.hbm [resolvable:$true] %s1746
      %1752 = dma.vmem_to_hbm [thread:$0]  %s1745, 512, %s1747, [#allocation7], 128, 128, 8
    $region41: #{tpu_custom_call.1} parent=1 // pred_fallthru
      _
    // Predicated region
    $region42: #{tpu_custom_call.1} parent=1 // pred_check
      _
    $region43: #{tpu_custom_call.1} parent=1 // pred_check_branch
      %1754 = sbr.rel (0) target = $region45
    $region44: #{tpu_custom_call.1} parent=1 // pred_region
      %1756 = dma.done [#allocation4], 512
    $region45: #{tpu_custom_call.1} parent=1 // pred_fallthru
      _
    // Predicated region
    $region46: #{tpu_custom_call.1} parent=1 // pred_check
      _
    $region47: #{tpu_custom_call.1} parent=1 // pred_check_branch
      %1758 = sbr.rel (0) target = $region49
    $region48: #{tpu_custom_call.1} parent=1 // pred_region
      %1760 = dma.done [#allocation7], 512
    $region49: #{tpu_custom_call.1} parent=1 // pred_fallthru
      _
    // Predicated region
    $region50: #{tpu_custom_call.1} parent=1 // pred_check
      _
    $region51: #{tpu_custom_call.1} parent=1 // pred_check_branch
      %1762 = sbr.rel (0) target = $region53
    $region52: #{tpu_custom_call.1} parent=1 // pred_region
      %1764 = dma.done [#allocation7], 512
    $region53: #{tpu_custom_call.1} parent=1 // pred_fallthru
      _
    %1765 = vsyncpa [#allocation3], 1
    %1766 = vsyncpa [#allocation4], 1
    %1767 = vsyncpa [#allocation7], 1

</llo_original>
